<compile_context>
chip_gen: v5e
topology: v5e:2x2
jax: 0.10.0
libtpu: 0.0.40
codegen_flags: <defaults>
</compile_context>

<pallas_src>
import jax
import jax.numpy as jnp
from jax.experimental import pallas as pl
from jax.experimental.pallas import tpu as pltpu


# --------------------------------------------------------------------------
# Host-side (trace-time) helpers
# --------------------------------------------------------------------------
def _round_up(x: int, m: int) -> int:
    return ((x + m - 1) // m) * m


def _sublane(dtype) -> int:
    # bf16 packs 16 sublanes per vreg; f32 packs 8.
    return 16 if jnp.dtype(dtype).itemsize == 2 else 8


def _interp_matrix(out_size: int, in_size: int, dtype=jnp.float32) -> jnp.ndarray:
    """1-D linear interpolation matrix (out_size, in_size), align_corners=True."""
    if out_size == 1 or in_size == 1:
        w = jnp.zeros((out_size, in_size), dtype)
        return w.at[:, 0].set(1.0)
    i = jnp.arange(out_size, dtype=jnp.float32)
    src = i * (in_size - 1) / (out_size - 1)          # align_corners=True mapping
    lo = jnp.clip(jnp.floor(src), 0, in_size - 1).astype(jnp.int32)
    hi = jnp.clip(lo + 1, 0, in_size - 1)
    frac = src - lo.astype(jnp.float32)
    cols = jnp.arange(in_size)
    onehot_lo = (cols[None, :] == lo[:, None]).astype(jnp.float32)
    onehot_hi = (cols[None, :] == hi[:, None]).astype(jnp.float32)
    m = (1.0 - frac)[:, None] * onehot_lo + frac[:, None] * onehot_hi
    return m.astype(dtype)


def _bilinear_matrix(h_in, w_in, h_out, w_out, dtype):
    """Combined 2-D interpolation matrix, shape (H*W, H_out*W_out)."""
    wh = _interp_matrix(h_out, h_in, jnp.float32)     # (H_out, H_in)
    ww = _interp_matrix(w_out, w_in, jnp.float32)     # (W_out, W_in)
    m = jnp.einsum("oh,pw->hwop", wh, ww)             # (H_in, W_in, H_out, W_out)
    return m.reshape(h_in * w_in, h_out * w_out).astype(dtype)


def _tpu_vmem_capacity_bytes() -> int:
    """Physical VMEM per core; generation-aware fallback if the query fails."""
    try:
        cap = getattr(pltpu.get_tpu_info(), "vmem_capacity_bytes", None)
        if cap:
            return int(cap)
    except Exception:
        pass
    try:
        kind = jax.devices()[0].device_kind.lower()
    except Exception:
        kind = ""
    if any(t in kind for t in ("v5 lite", "v5e", "v5litepod", "v6e", "v6 lite", "trillium")):
        return 128 * 1024 * 1024
    return 64 * 1024 * 1024   # v7x / unknown: conservative


def _pick_block_rows(rows, in_cols, out_cols, itemsize, avail_bytes, sublane, row_cap):
    """Largest legal row tile that fits double-buffered in+out in `avail_bytes`."""
    per_row = (in_cols + out_cols) * itemsize
    by_vmem = max(sublane, avail_bytes // (2 * per_row))
    blk = int(min(row_cap, by_vmem, rows))
    if blk >= rows:
        # Whole batch fits one block: split in two so a 2-TensorCore chip
        # (v7x) can shard the "parallel" grid axis across both cores.
        if rows >= 2 * sublane:
            return int(min(_round_up(pl.cdiv(rows, 2), sublane), rows))
        return rows
    return max(sublane, (blk // sublane) * sublane)


# --------------------------------------------------------------------------
# Kernel: one lane-dense matmul against a VMEM-resident matrix
# --------------------------------------------------------------------------
def _matmul_kernel(x_ref, m_ref, o_ref):
    # x_ref: (TR, K)   lane-dense input tile
    # m_ref: (K, N)    VMEM-resident interpolation matrix
    # o_ref: (TR, N)   lane-dense output tile
    o_ref[...] = jnp.dot(
        x_ref[...], m_ref[...], preferred_element_type=jnp.float32
    ).astype(o_ref.dtype)


def _tiled_matmul(x2d, m, out_dtype, *, budget, cap):
    """rows(x2d) @ m with a resident weight and a row-tiled 1-D grid."""
    R, K = x2d.shape
    Nc = m.shape[1]
    isize = jnp.dtype(x2d.dtype).itemsize
    wsize = jnp.dtype(m.dtype).itemsize
    sublane = _sublane(x2d.dtype)
    weight_bytes = K * Nc * wsize

    row_cap = 2048 if cap >= (96 << 20) else 1024
    avail = max(budget - weight_bytes, 4 * sublane * (K + Nc) * isize)
    block_r = _pick_block_rows(R, K, Nc, isize, avail, sublane, row_cap)
    grid_r = pl.cdiv(R, block_r)

    cost = pl.CostEstimate(
        flops=2 * R * K * Nc,
        transcendentals=0,
        bytes_accessed=R * (K + Nc) * isize + weight_bytes,
    )

    def run(weight_buffers):
        w_kwargs = {}
        if weight_buffers == 1:
            # Constant index_map -> never re-fetched; one buffer is enough.
            w_kwargs = dict(pipeline_mode=pl.Buffered(1))
        footprint = weight_buffers * weight_bytes + 2 * block_r * (K + Nc) * isize
        vmem_limit = int(min(max(footprint * 1.3, 4 << 20), 0.9 * cap))
        return pl.pallas_call(
            _matmul_kernel,
            out_shape=jax.ShapeDtypeStruct((R, Nc), out_dtype),
            grid_spec=pltpu.PrefetchScalarGridSpec(
                num_scalar_prefetch=0,
                grid=(grid_r,),
                in_specs=[
                    pl.BlockSpec((block_r, K), lambda i: (i, 0)),
                    pl.BlockSpec((K, Nc), lambda i: (0, 0), **w_kwargs),
                ],
                out_specs=pl.BlockSpec((block_r, Nc), lambda i: (i, 0)),
            ),
            compiler_params=pltpu.CompilerParams(
                dimension_semantics=("parallel",),
                vmem_limit_bytes=vmem_limit,
            ),
            cost_estimate=cost,
        )(x2d, m)

    try:
        return run(1)     # single-buffered resident weight
    except Exception:
        # TODO(synk): pl.Buffered(1) not supported on this JAX build; fall
        # back to the default double-buffered weight.
        return run(2)


# --------------------------------------------------------------------------
# Upsample wrapper (dense Kronecker path + separable two-pass path)
# --------------------------------------------------------------------------
def upsample_bilinear(x: jnp.ndarray, scale_factor: int = 2, *, force_separable=False):
    """Bilinear upsample (align_corners=True), NCHW in / NCHW out."""
    N, C, H, W = x.shape
    Ho, Wo = H * scale_factor, W * scale_factor
    B = N * C
    HW, HoWo = H * W, Ho * Wo

    isize = jnp.dtype(x.dtype).itemsize
    # Keep weights in f32 for f32 data (faithful to PyTorch); bf16 only if the
    # data itself is bf16.
    w_dtype = jnp.bfloat16 if x.dtype == jnp.bfloat16 else jnp.float32
    wsize = jnp.dtype(w_dtype).itemsize

    cap = _tpu_vmem_capacity_bytes()
    budget = int(cap * 0.6)
    dense_weight_bytes = HW * HoWo * wsize

    dense_ok = (not force_separable) and (
        dense_weight_bytes <= min(4 << 20, budget // 4)
        and (budget - dense_weight_bytes)
        >= 2 * _sublane(x.dtype) * (HW + HoWo) * isize
    )

    if dense_ok:
        # ---- Dense path: one matmul against the Kronecker matrix. ----
        m = _bilinear_matrix(H, W, Ho, Wo, w_dtype)          # (HW, HoWo)
        out_flat = _tiled_matmul(x.reshape(B, HW), m, x.dtype,
                                 budget=budget, cap=cap)
        return out_flat.reshape(N, C, Ho, Wo)

    # ---- Separable path: W-pass, transpose, H-pass (tiny resident weights).
    wwT = _interp_matrix(Wo, W, jnp.float32).T.astype(w_dtype)   # (W, Wo)
    whT = _interp_matrix(Ho, H, jnp.float32).T.astype(w_dtype)   # (H, Ho)

    # Pass 1: interpolate along W.  (B*H, W) @ (W, Wo) -> (B*H, Wo)
    t = _tiled_matmul(x.reshape(B * H, W), wwT, x.dtype, budget=budget, cap=cap)
    # Layout plumbing between the passes (plain XLA transpose in HBM).
    t = t.reshape(B, H, Wo).transpose(0, 2, 1).reshape(B * Wo, H)
    # Pass 2: interpolate along H.  (B*Wo, H) @ (H, Ho) -> (B*Wo, Ho)
    u = _tiled_matmul(t, whT, x.dtype, budget=budget, cap=cap)
    out = u.reshape(B, Wo, Ho).transpose(0, 2, 1)
    return out.reshape(N, C, Ho, Wo)


# --------------------------------------------------------------------------
# Pure-JAX reference (same math as PyTorch bilinear, align_corners=True)
# --------------------------------------------------------------------------
def _reference_upsample(x: jnp.ndarray, scale_factor: int = 2) -> jnp.ndarray:
    N, C, H, W = x.shape
    wh = _interp_matrix(H * scale_factor, H)
    ww = _interp_matrix(W * scale_factor, W)
    return jnp.einsum("oh,nchw,pw->ncop", wh, x, ww)


if __name__ == "__main__":
    key = jax.random.PRNGKey(0)
    x = jax.random.normal(key, (2, 4, 16, 16), dtype=jnp.float32)

    ref = _reference_upsample(x, scale_factor=2)

    # Dense (single-matmul) path — used for small spatial sizes.
    out_dense = jax.block_until_ready(upsample_bilinear(x, scale_factor=2))
    assert out_dense.shape == (2, 4, 32, 32), out_dense.shape
    err_d = float(jnp.max(jnp.abs(out_dense - ref)))
    assert jnp.allclose(out_dense, ref, atol=1e-4, rtol=1e-4), f"dense mismatch: {err_d}"

    # Separable two-pass path — used for larger spatial sizes (forced here).
    out_sep = jax.block_until_ready(upsample_bilinear(x, scale_factor=2,
                                                      force_separable=True))
    err_s = float(jnp.max(jnp.abs(out_sep - ref)))
    assert jnp.allclose(out_sep, ref, atol=1e-4, rtol=1e-4), f"separable mismatch: {err_s}"

    print("KERNEL_OK")
</pallas_src>

<mosaic_0001>
module attributes {stable_mosaic.version = 11 : i64} {
  func.func @_matmul_kernel(%arg0: i32, %arg1: memref<8x256xf32, #tpu.memory_space<vmem>>, %arg2: memref<256x1024xf32, #tpu.memory_space<vmem>>, %arg3: memref<8x1024xf32, #tpu.memory_space<vmem>>) attributes {dimension_semantics = [#tpu.dimension_semantics<parallel>], iteration_bounds = array<i64: 1>, scalar_prefetch = 0 : i64, scratch_operands = 0 : i64, tpu.core_type = #tpu.core_type<tc>, window_params = [{transform_indices = @transform_0, window_bounds = array<i64: 8, 256>}, {pipeline_mode = #tpu.pipeline_mode<synchronous>, transform_indices = @transform_1, window_bounds = array<i64: 256, 1024>}, {transform_indices = @transform_2, window_bounds = array<i64: 8, 1024>}]} {
    %c0 = arith.constant 0 : index
    %c0_0 = arith.constant 0 : index
    %0 = vector.load %arg1[%c0, %c0_0] : memref<8x256xf32, #tpu.memory_space<vmem>>, vector<8x256xf32>
    %c0_1 = arith.constant 0 : index
    %c0_2 = arith.constant 0 : index
    %1 = vector.load %arg2[%c0_1, %c0_2] : memref<256x1024xf32, #tpu.memory_space<vmem>>, vector<256x1024xf32>
    %cst = arith.constant dense<0.000000e+00> : vector<8x1024xf32>
    %2 = tpu.matmul %0, %1, %cst {dimension_numbers = #tpu.dot_dimension_numbers<[1], [0], [0], [1], [0, 0, 1, 1], [], []>} : vector<8x256xf32>, vector<256x1024xf32>, vector<8x1024xf32> -> vector<8x1024xf32>
    %c0_3 = arith.constant 0 : index
    %c0_4 = arith.constant 0 : index
    %3 = vector.load %arg3[%c0_3, %c0_4] : memref<8x1024xf32, #tpu.memory_space<vmem>>, vector<8x1024xf32>
    tpu.vector_store %arg3[%c0_3, %c0_4], %2 {strides = array<i32>} : memref<8x1024xf32, #tpu.memory_space<vmem>>, vector<8x1024xf32>,
    return
  }
  func.func @transform_0(%arg0: i32) -> (i32, i32) {
    %c0_i32 = arith.constant 0 : i32
    %c0_i32_0 = arith.constant 0 : i32
    return %arg0, %c0_i32 : i32, i32
  }
  func.func @transform_1(%arg0: i32) -> (i32, i32) {
    %c0_i32 = arith.constant 0 : i32
    %c0_i32_0 = arith.constant 0 : i32
    %c0_i32_1 = arith.constant 0 : i32
    return %c0_i32, %c0_i32_0 : i32, i32
  }
  func.func @transform_2(%arg0: i32) -> (i32, i32) {
    %c0_i32 = arith.constant 0 : i32
    %c0_i32_0 = arith.constant 0 : i32
    return %arg0, %c0_i32 : i32, i32
  }
}

module attributes {stable_mosaic.version = 11 : i64} {
  func.func @_matmul_kernel(%arg0: i32, %arg1: memref<8x256xf32, #tpu.memory_space<vmem>>, %arg2: memref<256x1024xf32, #tpu.memory_space<vmem>>, %arg3: memref<8x1024xf32, #tpu.memory_space<vmem>>) attributes {dimension_semantics = [#tpu.dimension_semantics<parallel>], iteration_bounds = array<i64: 1>, scalar_prefetch = 0 : i64, scratch_operands = 0 : i64, tpu.core_type = #tpu.core_type<tc>, window_params = [{transform_indices = @transform_0, window_bounds = array<i64: 8, 256>}, {pipeline_mode = #tpu.pipeline_mode<synchronous>, transform_indices = @transform_1, window_bounds = array<i64: 256, 1024>}, {transform_indices = @transform_2, window_bounds = array<i64: 8, 1024>}]} {
    %c0 = arith.constant 0 : index
    %c0_0 = arith.constant 0 : index
    %0 = vector.load %arg1[%c0, %c0_0] : memref<8x256xf32, #tpu.memory_space<vmem>>, vector<8x256xf32>
    %c0_1 = arith.constant 0 : index
    %c0_2 = arith.constant 0 : index
    %1 = vector.load %arg2[%c0_1, %c0_2] : memref<256x1024xf32, #tpu.memory_space<vmem>>, vector<256x1024xf32>
    %cst = arith.constant dense<0.000000e+00> : vector<8x1024xf32>
    %2 = tpu.matmul %0, %1, %cst {dimension_numbers = #tpu.dot_dimension_numbers<[1], [0], [0], [1], [0, 0, 1, 1], [], []>} : vector<8x256xf32>, vector<256x1024xf32>, vector<8x1024xf32> -> vector<8x1024xf32>
    %c0_3 = arith.constant 0 : index
    %c0_4 = arith.constant 0 : index
    %3 = vector.load %arg3[%c0_3, %c0_4] : memref<8x1024xf32, #tpu.memory_space<vmem>>, vector<8x1024xf32>
    tpu.vector_store %arg3[%c0_3, %c0_4], %2 {strides = array<i32>} : memref<8x1024xf32, #tpu.memory_space<vmem>>, vector<8x1024xf32>,
    return
  }
  func.func @transform_0(%arg0: i32) -> (i32, i32) {
    %c0_i32 = arith.constant 0 : i32
    %c0_i32_0 = arith.constant 0 : i32
    return %arg0, %c0_i32 : i32, i32
  }
  func.func @transform_1(%arg0: i32) -> (i32, i32) {
    %c0_i32 = arith.constant 0 : i32
    %c0_i32_0 = arith.constant 0 : i32
    %c0_i32_1 = arith.constant 0 : i32
    return %c0_i32, %c0_i32_0 : i32, i32
  }
  func.func @transform_2(%arg0: i32) -> (i32, i32) {
    %c0_i32 = arith.constant 0 : i32
    %c0_i32_0 = arith.constant 0 : i32
    return %arg0, %c0_i32 : i32, i32
  }
}

</mosaic_0001>

<llo_original>
// kernel: tpu_custom_call.1
$region0: #{tpu_custom_call.1}
  #allocation0 [shape = 'u32[]', space=smem, size = 0x4, offset = 0x4, fixed_abs, tag = 'smem constant byte address 0x4 - core index']
  #allocation1 [shape = 'u32[72,128]{1,0:T(1,128)}', space=vmem, size = 0x9000, scoped, tag = 'internal scratch']
  %s0 = inlined_call_operand.hbm [shape: f32[8,256], index: 0, kind: input, shape index: {}]
  %s1 = inlined_call_operand.hbm [shape: f32[256,1024], index: 1, kind: input, shape index: {}]
  %s2 = inlined_call_operand.hbm [shape: f32[8,1024], index: 2, kind: output, shape index: {}]
  %s3 = sld [smem:[#allocation0]]
  $region26: #{tpu_custom_call.1} parent=0
    _
  %s5 = ssub.s32 1, %s3
  %s6 = scalar_select 0, %s5, %s3
  $region1: #{tpu_custom_call.1} parent=0
    #allocation2 [shape = 'u8[8192]{0}', space=vmem, size = 0x2000, scoped, tag = 'input window, operand 0, single buffered']
    #allocation3 [shape = 's32[1]{0}', space=sflag, size = 0x4, scoped, tag = 'scoped memory for tpu_custom_call.1']
    #allocation4 [shape = 's32[1]{0}', space=sflag, size = 0x4, scoped, tag = 'scoped memory for tpu_custom_call.1']
    #allocation5 [shape = 'u8[1048576]{0}', space=vmem, size = 0x100000, scoped, tag = 'input window, operand 1, single buffered']
    #allocation6 [shape = 's32[1]{0}', space=sflag, size = 0x4, scoped, tag = 'scoped memory for tpu_custom_call.1']
    #allocation7 [shape = 'u8[32768]{0}', space=vmem, size = 0x8000, scoped, tag = 'output window, operand 0, single buffered']
    %7 = vsyncpa [#allocation3], 0
    %8 = vsyncpa [#allocation6], 0
    %9 = vsyncpa [#allocation4], 0
    // Predicated region
    $region2: #{tpu_custom_call.1} parent=1 // pred_check
      _
    $region3: #{tpu_custom_call.1} parent=1 // pred_check_branch
      %11 = sbr.rel (0) target = $region5
    $region4: #{tpu_custom_call.1} parent=1 // pred_region
      %13 = vsyncadd [#allocation3], 0
      %s15 = sshll.u32 %s0, 4
      %s16 = int_to_ptr.hbm [resolvable:$true] %s15
      %s17 = sshll.u32 [#allocation2], 4
      %s18 = int_to_ptr.vmem [resolvable:$true] %s17
      %20 = dma.hbm_to_vmem [thread:$0]  %s16, 256, %s18, [#allocation3]
    $region5: #{tpu_custom_call.1} parent=1 // pred_fallthru
      _
    // Predicated region
    $region6: #{tpu_custom_call.1} parent=1 // pred_check
      _
    $region7: #{tpu_custom_call.1} parent=1 // pred_check_branch
      %22 = sbr.rel (0) target = $region9
    $region8: #{tpu_custom_call.1} parent=1 // pred_region
      %24 = vsyncadd [#allocation6], 0
      %s25 = sshll.u32 %s1, 4
      %s26 = int_to_ptr.hbm [resolvable:$true] %s25
      %s27 = sshll.u32 [#allocation5], 4
      %s28 = int_to_ptr.vmem [resolvable:$true] %s27
      %33 = dma.hbm_to_vmem [thread:$0]  %s26, 32768, %s28, [#allocation6], 1024, 1024, 64
    $region9: #{tpu_custom_call.1} parent=1 // pred_fallthru
      _
    // Predicated region
    $region10: #{tpu_custom_call.1} parent=1 // pred_check
      _
    $region11: #{tpu_custom_call.1} parent=1 // pred_check_branch
      %35 = sbr.rel (0) target = $region13
    $region12: #{tpu_custom_call.1} parent=1 // pred_region
      %37 = dma.done [#allocation3], 256
    $region13: #{tpu_custom_call.1} parent=1 // pred_fallthru
      _
    // Predicated region
    $region14: #{tpu_custom_call.1} parent=1 // pred_check
      _
    $region15: #{tpu_custom_call.1} parent=1 // pred_check_branch
      %39 = sbr.rel (0) target = $region17
    $region16: #{tpu_custom_call.1} parent=1 // pred_region
      %41 = dma.done [#allocation6], 32768
    $region17: #{tpu_custom_call.1} parent=1 // pred_fallthru
      _
    %v42 = vld [vmem:[#allocation2] sm:$0xff]
    %v43 = vld [vmem:[#allocation2 + $0x8] sm:$0xff]
    %v44 = vld [vmem:[#allocation5] sm:$0xff]
    %v45 = vld [vmem:[#allocation5 + $0x8] sm:$0xff]
    %v46 = vld [vmem:[#allocation5 + $0x10] sm:$0xff]
    %v47 = vld [vmem:[#allocation5 + $0x18] sm:$0xff]
    %v48 = vld [vmem:[#allocation5 + $0x20] sm:$0xff]
    %v49 = vld [vmem:[#allocation5 + $0x28] sm:$0xff]
    %v50 = vld [vmem:[#allocation5 + $0x30] sm:$0xff]
    %v51 = vld [vmem:[#allocation5 + $0x38] sm:$0xff]
    %v52 = vld [vmem:[#allocation5 + $0x40] sm:$0xff]
    %v53 = vld [vmem:[#allocation5 + $0x48] sm:$0xff]
    %v54 = vld [vmem:[#allocation5 + $0x50] sm:$0xff]
    %v55 = vld [vmem:[#allocation5 + $0x58] sm:$0xff]
    %v56 = vld [vmem:[#allocation5 + $0x60] sm:$0xff]
    %v57 = vld [vmem:[#allocation5 + $0x68] sm:$0xff]
    %v58 = vld [vmem:[#allocation5 + $0x70] sm:$0xff]
    %v59 = vld [vmem:[#allocation5 + $0x78] sm:$0xff]
    %v60 = vld [vmem:[#allocation5 + $0x80] sm:$0xff]
    %v61 = vld [vmem:[#allocation5 + $0x88] sm:$0xff]
    %v62 = vld [vmem:[#allocation5 + $0x90] sm:$0xff]
    %v63 = vld [vmem:[#allocation5 + $0x98] sm:$0xff]
    %v64 = vld [vmem:[#allocation5 + $0xa0] sm:$0xff]
    %v65 = vld [vmem:[#allocation5 + $0xa8] sm:$0xff]
    %v66 = vld [vmem:[#allocation5 + $0xb0] sm:$0xff]
    %v67 = vld [vmem:[#allocation5 + $0xb8] sm:$0xff]
    %v68 = vld [vmem:[#allocation5 + $0xc0] sm:$0xff]
    %v69 = vld [vmem:[#allocation5 + $0xc8] sm:$0xff]
    %v70 = vld [vmem:[#allocation5 + $0xd0] sm:$0xff]
    %v71 = vld [vmem:[#allocation5 + $0xd8] sm:$0xff]
    %v72 = vld [vmem:[#allocation5 + $0xe0] sm:$0xff]
    %v73 = vld [vmem:[#allocation5 + $0xe8] sm:$0xff]
    %v74 = vld [vmem:[#allocation5 + $0xf0] sm:$0xff]
    %v75 = vld [vmem:[#allocation5 + $0xf8] sm:$0xff]
    %v76 = vld [vmem:[#allocation5 + $0x100] sm:$0xff]
    %v77 = vld [vmem:[#allocation5 + $0x108] sm:$0xff]
    %v78 = vld [vmem:[#allocation5 + $0x110] sm:$0xff]
    %v79 = vld [vmem:[#allocation5 + $0x118] sm:$0xff]
    %v80 = vld [vmem:[#allocation5 + $0x120] sm:$0xff]
    %v81 = vld [vmem:[#allocation5 + $0x128] sm:$0xff]
    %v82 = vld [vmem:[#allocation5 + $0x130] sm:$0xff]
    %v83 = vld [vmem:[#allocation5 + $0x138] sm:$0xff]
    %v84 = vld [vmem:[#allocation5 + $0x140] sm:$0xff]
    %v85 = vld [vmem:[#allocation5 + $0x148] sm:$0xff]
    %v86 = vld [vmem:[#allocation5 + $0x150] sm:$0xff]
    %v87 = vld [vmem:[#allocation5 + $0x158] sm:$0xff]
    %v88 = vld [vmem:[#allocation5 + $0x160] sm:$0xff]
    %v89 = vld [vmem:[#allocation5 + $0x168] sm:$0xff]
    %v90 = vld [vmem:[#allocation5 + $0x170] sm:$0xff]
    %v91 = vld [vmem:[#allocation5 + $0x178] sm:$0xff]
    %v92 = vld [vmem:[#allocation5 + $0x180] sm:$0xff]
    %v93 = vld [vmem:[#allocation5 + $0x188] sm:$0xff]
    %v94 = vld [vmem:[#allocation5 + $0x190] sm:$0xff]
    %v95 = vld [vmem:[#allocation5 + $0x198] sm:$0xff]
    %v96 = vld [vmem:[#allocation5 + $0x1a0] sm:$0xff]
    %v97 = vld [vmem:[#allocation5 + $0x1a8] sm:$0xff]
    %v98 = vld [vmem:[#allocation5 + $0x1b0] sm:$0xff]
    %v99 = vld [vmem:[#allocation5 + $0x1b8] sm:$0xff]
    %v100 = vld [vmem:[#allocation5 + $0x1c0] sm:$0xff]
    %v101 = vld [vmem:[#allocation5 + $0x1c8] sm:$0xff]
    %v102 = vld [vmem:[#allocation5 + $0x1d0] sm:$0xff]
    %v103 = vld [vmem:[#allocation5 + $0x1d8] sm:$0xff]
    %v104 = vld [vmem:[#allocation5 + $0x1e0] sm:$0xff]
    %v105 = vld [vmem:[#allocation5 + $0x1e8] sm:$0xff]
    %v106 = vld [vmem:[#allocation5 + $0x1f0] sm:$0xff]
    %v107 = vld [vmem:[#allocation5 + $0x1f8] sm:$0xff]
    %v108 = vld [vmem:[#allocation5 + $0x200] sm:$0xff]
    %v109 = vld [vmem:[#allocation5 + $0x208] sm:$0xff]
    %v110 = vld [vmem:[#allocation5 + $0x210] sm:$0xff]
    %v111 = vld [vmem:[#allocation5 + $0x218] sm:$0xff]
    %v112 = vld [vmem:[#allocation5 + $0x220] sm:$0xff]
    %v113 = vld [vmem:[#allocation5 + $0x228] sm:$0xff]
    %v114 = vld [vmem:[#allocation5 + $0x230] sm:$0xff]
    %v115 = vld [vmem:[#allocation5 + $0x238] sm:$0xff]
    %v116 = vld [vmem:[#allocation5 + $0x240] sm:$0xff]
    %v117 = vld [vmem:[#allocation5 + $0x248] sm:$0xff]
    %v118 = vld [vmem:[#allocation5 + $0x250] sm:$0xff]
    %v119 = vld [vmem:[#allocation5 + $0x258] sm:$0xff]
    %v120 = vld [vmem:[#allocation5 + $0x260] sm:$0xff]
    %v121 = vld [vmem:[#allocation5 + $0x268] sm:$0xff]
    %v122 = vld [vmem:[#allocation5 + $0x270] sm:$0xff]
    %v123 = vld [vmem:[#allocation5 + $0x278] sm:$0xff]
    %v124 = vld [vmem:[#allocation5 + $0x280] sm:$0xff]
    %v125 = vld [vmem:[#allocation5 + $0x288] sm:$0xff]
    %v126 = vld [vmem:[#allocation5 + $0x290] sm:$0xff]
    %v127 = vld [vmem:[#allocation5 + $0x298] sm:$0xff]
    %v128 = vld [vmem:[#allocation5 + $0x2a0] sm:$0xff]
    %v129 = vld [vmem:[#allocation5 + $0x2a8] sm:$0xff]
    %v130 = vld [vmem:[#allocation5 + $0x2b0] sm:$0xff]
    %v131 = vld [vmem:[#allocation5 + $0x2b8] sm:$0xff]
    %v132 = vld [vmem:[#allocation5 + $0x2c0] sm:$0xff]
    %v133 = vld [vmem:[#allocation5 + $0x2c8] sm:$0xff]
    %v134 = vld [vmem:[#allocation5 + $0x2d0] sm:$0xff]
    %v135 = vld [vmem:[#allocation5 + $0x2d8] sm:$0xff]
    %v136 = vld [vmem:[#allocation5 + $0x2e0] sm:$0xff]
    %v137 = vld [vmem:[#allocation5 + $0x2e8] sm:$0xff]
    %v138 = vld [vmem:[#allocation5 + $0x2f0] sm:$0xff]
    %v139 = vld [vmem:[#allocation5 + $0x2f8] sm:$0xff]
    %v140 = vld [vmem:[#allocation5 + $0x300] sm:$0xff]
    %v141 = vld [vmem:[#allocation5 + $0x308] sm:$0xff]
    %v142 = vld [vmem:[#allocation5 + $0x310] sm:$0xff]
    %v143 = vld [vmem:[#allocation5 + $0x318] sm:$0xff]
    %v144 = vld [vmem:[#allocation5 + $0x320] sm:$0xff]
    %v145 = vld [vmem:[#allocation5 + $0x328] sm:$0xff]
    %v146 = vld [vmem:[#allocation5 + $0x330] sm:$0xff]
    %v147 = vld [vmem:[#allocation5 + $0x338] sm:$0xff]
    %v148 = vld [vmem:[#allocation5 + $0x340] sm:$0xff]
    %v149 = vld [vmem:[#allocation5 + $0x348] sm:$0xff]
    %v150 = vld [vmem:[#allocation5 + $0x350] sm:$0xff]
    %v151 = vld [vmem:[#allocation5 + $0x358] sm:$0xff]
    %v152 = vld [vmem:[#allocation5 + $0x360] sm:$0xff]
    %v153 = vld [vmem:[#allocation5 + $0x368] sm:$0xff]
    %v154 = vld [vmem:[#allocation5 + $0x370] sm:$0xff]
    %v155 = vld [vmem:[#allocation5 + $0x378] sm:$0xff]
    %v156 = vld [vmem:[#allocation5 + $0x380] sm:$0xff]
    %v157 = vld [vmem:[#allocation5 + $0x388] sm:$0xff]
    %v158 = vld [vmem:[#allocation5 + $0x390] sm:$0xff]
    %v159 = vld [vmem:[#allocation5 + $0x398] sm:$0xff]
    %v160 = vld [vmem:[#allocation5 + $0x3a0] sm:$0xff]
    %v161 = vld [vmem:[#allocation5 + $0x3a8] sm:$0xff]
    %v162 = vld [vmem:[#allocation5 + $0x3b0] sm:$0xff]
    %v163 = vld [vmem:[#allocation5 + $0x3b8] sm:$0xff]
    %v164 = vld [vmem:[#allocation5 + $0x3c0] sm:$0xff]
    %v165 = vld [vmem:[#allocation5 + $0x3c8] sm:$0xff]
    %v166 = vld [vmem:[#allocation5 + $0x3d0] sm:$0xff]
    %v167 = vld [vmem:[#allocation5 + $0x3d8] sm:$0xff]
    %v168 = vld [vmem:[#allocation5 + $0x3e0] sm:$0xff]
    %v169 = vld [vmem:[#allocation5 + $0x3e8] sm:$0xff]
    %v170 = vld [vmem:[#allocation5 + $0x3f0] sm:$0xff]
    %v171 = vld [vmem:[#allocation5 + $0x3f8] sm:$0xff]
    %v172 = vld [vmem:[#allocation5 + $0x400] sm:$0xff]
    %v173 = vld [vmem:[#allocation5 + $0x408] sm:$0xff]
    %v174 = vld [vmem:[#allocation5 + $0x410] sm:$0xff]
    %v175 = vld [vmem:[#allocation5 + $0x418] sm:$0xff]
    %v176 = vld [vmem:[#allocation5 + $0x420] sm:$0xff]
    %v177 = vld [vmem:[#allocation5 + $0x428] sm:$0xff]
    %v178 = vld [vmem:[#allocation5 + $0x430] sm:$0xff]
    %v179 = vld [vmem:[#allocation5 + $0x438] sm:$0xff]
    %v180 = vld [vmem:[#allocation5 + $0x440] sm:$0xff]
    %v181 = vld [vmem:[#allocation5 + $0x448] sm:$0xff]
    %v182 = vld [vmem:[#allocation5 + $0x450] sm:$0xff]
    %v183 = vld [vmem:[#allocation5 + $0x458] sm:$0xff]
    %v184 = vld [vmem:[#allocation5 + $0x460] sm:$0xff]
    %v185 = vld [vmem:[#allocation5 + $0x468] sm:$0xff]
    %v186 = vld [vmem:[#allocation5 + $0x470] sm:$0xff]
    %v187 = vld [vmem:[#allocation5 + $0x478] sm:$0xff]
    %v188 = vld [vmem:[#allocation5 + $0x480] sm:$0xff]
    %v189 = vld [vmem:[#allocation5 + $0x488] sm:$0xff]
    %v190 = vld [vmem:[#allocation5 + $0x490] sm:$0xff]
    %v191 = vld [vmem:[#allocation5 + $0x498] sm:$0xff]
    %v192 = vld [vmem:[#allocation5 + $0x4a0] sm:$0xff]
    %v193 = vld [vmem:[#allocation5 + $0x4a8] sm:$0xff]
    %v194 = vld [vmem:[#allocation5 + $0x4b0] sm:$0xff]
    %v195 = vld [vmem:[#allocation5 + $0x4b8] sm:$0xff]
    %v196 = vld [vmem:[#allocation5 + $0x4c0] sm:$0xff]
    %v197 = vld [vmem:[#allocation5 + $0x4c8] sm:$0xff]
    %v198 = vld [vmem:[#allocation5 + $0x4d0] sm:$0xff]
    %v199 = vld [vmem:[#allocation5 + $0x4d8] sm:$0xff]
    %v200 = vld [vmem:[#allocation5 + $0x4e0] sm:$0xff]
    %v201 = vld [vmem:[#allocation5 + $0x4e8] sm:$0xff]
    %v202 = vld [vmem:[#allocation5 + $0x4f0] sm:$0xff]
    %v203 = vld [vmem:[#allocation5 + $0x4f8] sm:$0xff]
    %v204 = vld [vmem:[#allocation5 + $0x500] sm:$0xff]
    %v205 = vld [vmem:[#allocation5 + $0x508] sm:$0xff]
    %v206 = vld [vmem:[#allocation5 + $0x510] sm:$0xff]
    %v207 = vld [vmem:[#allocation5 + $0x518] sm:$0xff]
    %v208 = vld [vmem:[#allocation5 + $0x520] sm:$0xff]
    %v209 = vld [vmem:[#allocation5 + $0x528] sm:$0xff]
    %v210 = vld [vmem:[#allocation5 + $0x530] sm:$0xff]
    %v211 = vld [vmem:[#allocation5 + $0x538] sm:$0xff]
    %v212 = vld [vmem:[#allocation5 + $0x540] sm:$0xff]
    %v213 = vld [vmem:[#allocation5 + $0x548] sm:$0xff]
    %v214 = vld [vmem:[#allocation5 + $0x550] sm:$0xff]
    %v215 = vld [vmem:[#allocation5 + $0x558] sm:$0xff]
    %v216 = vld [vmem:[#allocation5 + $0x560] sm:$0xff]
    %v217 = vld [vmem:[#allocation5 + $0x568] sm:$0xff]
    %v218 = vld [vmem:[#allocation5 + $0x570] sm:$0xff]
    %v219 = vld [vmem:[#allocation5 + $0x578] sm:$0xff]
    %v220 = vld [vmem:[#allocation5 + $0x580] sm:$0xff]
    %v221 = vld [vmem:[#allocation5 + $0x588] sm:$0xff]
    %v222 = vld [vmem:[#allocation5 + $0x590] sm:$0xff]
    %v223 = vld [vmem:[#allocation5 + $0x598] sm:$0xff]
    %v224 = vld [vmem:[#allocation5 + $0x5a0] sm:$0xff]
    %v225 = vld [vmem:[#allocation5 + $0x5a8] sm:$0xff]
    %v226 = vld [vmem:[#allocation5 + $0x5b0] sm:$0xff]
    %v227 = vld [vmem:[#allocation5 + $0x5b8] sm:$0xff]
    %v228 = vld [vmem:[#allocation5 + $0x5c0] sm:$0xff]
    %v229 = vld [vmem:[#allocation5 + $0x5c8] sm:$0xff]
    %v230 = vld [vmem:[#allocation5 + $0x5d0] sm:$0xff]
    %v231 = vld [vmem:[#allocation5 + $0x5d8] sm:$0xff]
    %v232 = vld [vmem:[#allocation5 + $0x5e0] sm:$0xff]
    %v233 = vld [vmem:[#allocation5 + $0x5e8] sm:$0xff]
    %v234 = vld [vmem:[#allocation5 + $0x5f0] sm:$0xff]
    %v235 = vld [vmem:[#allocation5 + $0x5f8] sm:$0xff]
    %v236 = vld [vmem:[#allocation5 + $0x600] sm:$0xff]
    %v237 = vld [vmem:[#allocation5 + $0x608] sm:$0xff]
    %v238 = vld [vmem:[#allocation5 + $0x610] sm:$0xff]
    %v239 = vld [vmem:[#allocation5 + $0x618] sm:$0xff]
    %v240 = vld [vmem:[#allocation5 + $0x620] sm:$0xff]
    %v241 = vld [vmem:[#allocation5 + $0x628] sm:$0xff]
    %v242 = vld [vmem:[#allocation5 + $0x630] sm:$0xff]
    %v243 = vld [vmem:[#allocation5 + $0x638] sm:$0xff]
    %v244 = vld [vmem:[#allocation5 + $0x640] sm:$0xff]
    %v245 = vld [vmem:[#allocation5 + $0x648] sm:$0xff]
    %v246 = vld [vmem:[#allocation5 + $0x650] sm:$0xff]
    %v247 = vld [vmem:[#allocation5 + $0x658] sm:$0xff]
    %v248 = vld [vmem:[#allocation5 + $0x660] sm:$0xff]
    %v249 = vld [vmem:[#allocation5 + $0x668] sm:$0xff]
    %v250 = vld [vmem:[#allocation5 + $0x670] sm:$0xff]
    %v251 = vld [vmem:[#allocation5 + $0x678] sm:$0xff]
    %v252 = vld [vmem:[#allocation5 + $0x680] sm:$0xff]
    %v253 = vld [vmem:[#allocation5 + $0x688] sm:$0xff]
    %v254 = vld [vmem:[#allocation5 + $0x690] sm:$0xff]
    %v255 = vld [vmem:[#allocation5 + $0x698] sm:$0xff]
    %v256 = vld [vmem:[#allocation5 + $0x6a0] sm:$0xff]
    %v257 = vld [vmem:[#allocation5 + $0x6a8] sm:$0xff]
    %v258 = vld [vmem:[#allocation5 + $0x6b0] sm:$0xff]
    %v259 = vld [vmem:[#allocation5 + $0x6b8] sm:$0xff]
    %v260 = vld [vmem:[#allocation5 + $0x6c0] sm:$0xff]
    %v261 = vld [vmem:[#allocation5 + $0x6c8] sm:$0xff]
    %v262 = vld [vmem:[#allocation5 + $0x6d0] sm:$0xff]
    %v263 = vld [vmem:[#allocation5 + $0x6d8] sm:$0xff]
    %v264 = vld [vmem:[#allocation5 + $0x6e0] sm:$0xff]
    %v265 = vld [vmem:[#allocation5 + $0x6e8] sm:$0xff]
    %v266 = vld [vmem:[#allocation5 + $0x6f0] sm:$0xff]
    %v267 = vld [vmem:[#allocation5 + $0x6f8] sm:$0xff]
    %v268 = vld [vmem:[#allocation5 + $0x700] sm:$0xff]
    %v269 = vld [vmem:[#allocation5 + $0x708] sm:$0xff]
    %v270 = vld [vmem:[#allocation5 + $0x710] sm:$0xff]
    %v271 = vld [vmem:[#allocation5 + $0x718] sm:$0xff]
    %v272 = vld [vmem:[#allocation5 + $0x720] sm:$0xff]
    %v273 = vld [vmem:[#allocation5 + $0x728] sm:$0xff]
    %v274 = vld [vmem:[#allocation5 + $0x730] sm:$0xff]
    %v275 = vld [vmem:[#allocation5 + $0x738] sm:$0xff]
    %v276 = vld [vmem:[#allocation5 + $0x740] sm:$0xff]
    %v277 = vld [vmem:[#allocation5 + $0x748] sm:$0xff]
    %v278 = vld [vmem:[#allocation5 + $0x750] sm:$0xff]
    %v279 = vld [vmem:[#allocation5 + $0x758] sm:$0xff]
    %v280 = vld [vmem:[#allocation5 + $0x760] sm:$0xff]
    %v281 = vld [vmem:[#allocation5 + $0x768] sm:$0xff]
    %v282 = vld [vmem:[#allocation5 + $0x770] sm:$0xff]
    %v283 = vld [vmem:[#allocation5 + $0x778] sm:$0xff]
    %v284 = vld [vmem:[#allocation5 + $0x780] sm:$0xff]
    %v285 = vld [vmem:[#allocation5 + $0x788] sm:$0xff]
    %v286 = vld [vmem:[#allocation5 + $0x790] sm:$0xff]
    %v287 = vld [vmem:[#allocation5 + $0x798] sm:$0xff]
    %v288 = vld [vmem:[#allocation5 + $0x7a0] sm:$0xff]
    %v289 = vld [vmem:[#allocation5 + $0x7a8] sm:$0xff]
    %v290 = vld [vmem:[#allocation5 + $0x7b0] sm:$0xff]
    %v291 = vld [vmem:[#allocation5 + $0x7b8] sm:$0xff]
    %v292 = vld [vmem:[#allocation5 + $0x7c0] sm:$0xff]
    %v293 = vld [vmem:[#allocation5 + $0x7c8] sm:$0xff]
    %v294 = vld [vmem:[#allocation5 + $0x7d0] sm:$0xff]
    %v295 = vld [vmem:[#allocation5 + $0x7d8] sm:$0xff]
    %v296 = vld [vmem:[#allocation5 + $0x7e0] sm:$0xff]
    %v297 = vld [vmem:[#allocation5 + $0x7e8] sm:$0xff]
    %v298 = vld [vmem:[#allocation5 + $0x7f0] sm:$0xff]
    %v299 = vld [vmem:[#allocation5 + $0x7f8] sm:$0xff]
    %300 = vmatpush.msra.mxu0 %v164
    %301 = vmatpush.msra.mxu0 %v156
    %302 = vmatpush.msra.mxu0 %v148
    %303 = vmatpush.msra.mxu0 %v140
    %304 = vmatpush.msra.mxu0 %v132
    %305 = vmatpush.msra.mxu0 %v124
    %306 = vmatpush.msra.mxu0 %v116
    %307 = vmatpush.msra.mxu0 %v108
    %308 = vmatpush.msra.mxu0 %v100
    %309 = vmatpush.msra.mxu0 %v92
    %310 = vmatpush.msra.mxu0 %v84
    %311 = vmatpush.msra.mxu0 %v76
    %312 = vmatpush.msra.mxu0 %v68
    %313 = vmatpush.msra.mxu0 %v60
    %314 = vmatpush.msra.mxu0 %v52
    %315 = vmatpush.msra.mxu0 %v44
    %316 = vmatmul.f32.gmra.mxu0 %v42
    %v317 = vpop.f32.mrf.mxu0
    %v318 = vadd.f32 0.0, %v317
    %319 = vdwg.mxu0
    %320 = vmatpush.msra.mxu0 %v292
    %321 = vmatpush.msra.mxu0 %v284
    %322 = vmatpush.msra.mxu0 %v276
    %323 = vmatpush.msra.mxu0 %v268
    %324 = vmatpush.msra.mxu0 %v260
    %325 = vmatpush.msra.mxu0 %v252
    %326 = vmatpush.msra.mxu0 %v244
    %327 = vmatpush.msra.mxu0 %v236
    %328 = vmatpush.msra.mxu0 %v228
    %329 = vmatpush.msra.mxu0 %v220
    %330 = vmatpush.msra.mxu0 %v212
    %331 = vmatpush.msra.mxu0 %v204
    %332 = vmatpush.msra.mxu0 %v196
    %333 = vmatpush.msra.mxu0 %v188
    %334 = vmatpush.msra.mxu0 %v180
    %335 = vmatpush.msra.mxu0 %v172
    %336 = vmatmul.f32.gmra.mxu0 %v43
    %v337 = vpop.f32.mrf.mxu0
    %v338 = vadd.f32 %v318, %v337
    %339 = vdwg.mxu0
    %340 = vmatpush.msra.mxu0 %v165
    %341 = vmatpush.msra.mxu0 %v157
    %342 = vmatpush.msra.mxu0 %v149
    %343 = vmatpush.msra.mxu0 %v141
    %344 = vmatpush.msra.mxu0 %v133
    %345 = vmatpush.msra.mxu0 %v125
    %346 = vmatpush.msra.mxu0 %v117
    %347 = vmatpush.msra.mxu0 %v109
    %348 = vmatpush.msra.mxu0 %v101
    %349 = vmatpush.msra.mxu0 %v93
    %350 = vmatpush.msra.mxu0 %v85
    %351 = vmatpush.msra.mxu0 %v77
    %352 = vmatpush.msra.mxu0 %v69
    %353 = vmatpush.msra.mxu0 %v61
    %354 = vmatpush.msra.mxu0 %v53
    %355 = vmatpush.msra.mxu0 %v45
    %356 = vmatmul.f32.gmra.mxu0 %v42
    %v357 = vpop.f32.mrf.mxu0
    %v358 = vadd.f32 0.0, %v357
    %359 = vdwg.mxu0
    %360 = vmatpush.msra.mxu0 %v293
    %361 = vmatpush.msra.mxu0 %v285
    %362 = vmatpush.msra.mxu0 %v277
    %363 = vmatpush.msra.mxu0 %v269
    %364 = vmatpush.msra.mxu0 %v261
    %365 = vmatpush.msra.mxu0 %v253
    %366 = vmatpush.msra.mxu0 %v245
    %367 = vmatpush.msra.mxu0 %v237
    %368 = vmatpush.msra.mxu0 %v229
    %369 = vmatpush.msra.mxu0 %v221
    %370 = vmatpush.msra.mxu0 %v213
    %371 = vmatpush.msra.mxu0 %v205
    %372 = vmatpush.msra.mxu0 %v197
    %373 = vmatpush.msra.mxu0 %v189
    %374 = vmatpush.msra.mxu0 %v181
    %375 = vmatpush.msra.mxu0 %v173
    %376 = vmatmul.f32.gmra.mxu0 %v43
    %v377 = vpop.f32.mrf.mxu0
    %v378 = vadd.f32 %v358, %v377
    %379 = vdwg.mxu0
    %380 = vmatpush.msra.mxu0 %v166
    %381 = vmatpush.msra.mxu0 %v158
    %382 = vmatpush.msra.mxu0 %v150
    %383 = vmatpush.msra.mxu0 %v142
    %384 = vmatpush.msra.mxu0 %v134
    %385 = vmatpush.msra.mxu0 %v126
    %386 = vmatpush.msra.mxu0 %v118
    %387 = vmatpush.msra.mxu0 %v110
    %388 = vmatpush.msra.mxu0 %v102
    %389 = vmatpush.msra.mxu0 %v94
    %390 = vmatpush.msra.mxu0 %v86
    %391 = vmatpush.msra.mxu0 %v78
    %392 = vmatpush.msra.mxu0 %v70
    %393 = vmatpush.msra.mxu0 %v62
    %394 = vmatpush.msra.mxu0 %v54
    %395 = vmatpush.msra.mxu0 %v46
    %396 = vmatmul.f32.gmra.mxu0 %v42
    %v397 = vpop.f32.mrf.mxu0
    %v398 = vadd.f32 0.0, %v397
    %399 = vdwg.mxu0
    %400 = vmatpush.msra.mxu0 %v294
    %401 = vmatpush.msra.mxu0 %v286
    %402 = vmatpush.msra.mxu0 %v278
    %403 = vmatpush.msra.mxu0 %v270
    %404 = vmatpush.msra.mxu0 %v262
    %405 = vmatpush.msra.mxu0 %v254
    %406 = vmatpush.msra.mxu0 %v246
    %407 = vmatpush.msra.mxu0 %v238
    %408 = vmatpush.msra.mxu0 %v230
    %409 = vmatpush.msra.mxu0 %v222
    %410 = vmatpush.msra.mxu0 %v214
    %411 = vmatpush.msra.mxu0 %v206
    %412 = vmatpush.msra.mxu0 %v198
    %413 = vmatpush.msra.mxu0 %v190
    %414 = vmatpush.msra.mxu0 %v182
    %415 = vmatpush.msra.mxu0 %v174
    %416 = vmatmul.f32.gmra.mxu0 %v43
    %v417 = vpop.f32.mrf.mxu0
    %v418 = vadd.f32 %v398, %v417
    %419 = vdwg.mxu0
    %420 = vmatpush.msra.mxu0 %v167
    %421 = vmatpush.msra.mxu0 %v159
    %422 = vmatpush.msra.mxu0 %v151
    %423 = vmatpush.msra.mxu0 %v143
    %424 = vmatpush.msra.mxu0 %v135
    %425 = vmatpush.msra.mxu0 %v127
    %426 = vmatpush.msra.mxu0 %v119
    %427 = vmatpush.msra.mxu0 %v111
    %428 = vmatpush.msra.mxu0 %v103
    %429 = vmatpush.msra.mxu0 %v95
    %430 = vmatpush.msra.mxu0 %v87
    %431 = vmatpush.msra.mxu0 %v79
    %432 = vmatpush.msra.mxu0 %v71
    %433 = vmatpush.msra.mxu0 %v63
    %434 = vmatpush.msra.mxu0 %v55
    %435 = vmatpush.msra.mxu0 %v47
    %436 = vmatmul.f32.gmra.mxu0 %v42
    %v437 = vpop.f32.mrf.mxu0
    %v438 = vadd.f32 0.0, %v437
    %439 = vdwg.mxu0
    %440 = vmatpush.msra.mxu0 %v295
    %441 = vmatpush.msra.mxu0 %v287
    %442 = vmatpush.msra.mxu0 %v279
    %443 = vmatpush.msra.mxu0 %v271
    %444 = vmatpush.msra.mxu0 %v263
    %445 = vmatpush.msra.mxu0 %v255
    %446 = vmatpush.msra.mxu0 %v247
    %447 = vmatpush.msra.mxu0 %v239
    %448 = vmatpush.msra.mxu0 %v231
    %449 = vmatpush.msra.mxu0 %v223
    %450 = vmatpush.msra.mxu0 %v215
    %451 = vmatpush.msra.mxu0 %v207
    %452 = vmatpush.msra.mxu0 %v199
    %453 = vmatpush.msra.mxu0 %v191
    %454 = vmatpush.msra.mxu0 %v183
    %455 = vmatpush.msra.mxu0 %v175
    %456 = vmatmul.f32.gmra.mxu0 %v43
    %v457 = vpop.f32.mrf.mxu0
    %v458 = vadd.f32 %v438, %v457
    %459 = vdwg.mxu0
    %460 = vmatpush.msra.mxu0 %v168
    %461 = vmatpush.msra.mxu0 %v160
    %462 = vmatpush.msra.mxu0 %v152
    %463 = vmatpush.msra.mxu0 %v144
    %464 = vmatpush.msra.mxu0 %v136
    %465 = vmatpush.msra.mxu0 %v128
    %466 = vmatpush.msra.mxu0 %v120
    %467 = vmatpush.msra.mxu0 %v112
    %468 = vmatpush.msra.mxu0 %v104
    %469 = vmatpush.msra.mxu0 %v96
    %470 = vmatpush.msra.mxu0 %v88
    %471 = vmatpush.msra.mxu0 %v80
    %472 = vmatpush.msra.mxu0 %v72
    %473 = vmatpush.msra.mxu0 %v64
    %474 = vmatpush.msra.mxu0 %v56
    %475 = vmatpush.msra.mxu0 %v48
    %476 = vmatmul.f32.gmra.mxu0 %v42
    %v477 = vpop.f32.mrf.mxu0
    %v478 = vadd.f32 0.0, %v477
    %479 = vdwg.mxu0
    %480 = vmatpush.msra.mxu0 %v296
    %481 = vmatpush.msra.mxu0 %v288
    %482 = vmatpush.msra.mxu0 %v280
    %483 = vmatpush.msra.mxu0 %v272
    %484 = vmatpush.msra.mxu0 %v264
    %485 = vmatpush.msra.mxu0 %v256
    %486 = vmatpush.msra.mxu0 %v248
    %487 = vmatpush.msra.mxu0 %v240
    %488 = vmatpush.msra.mxu0 %v232
    %489 = vmatpush.msra.mxu0 %v224
    %490 = vmatpush.msra.mxu0 %v216
    %491 = vmatpush.msra.mxu0 %v208
    %492 = vmatpush.msra.mxu0 %v200
    %493 = vmatpush.msra.mxu0 %v192
    %494 = vmatpush.msra.mxu0 %v184
    %495 = vmatpush.msra.mxu0 %v176
    %496 = vmatmul.f32.gmra.mxu0 %v43
    %v497 = vpop.f32.mrf.mxu0
    %v498 = vadd.f32 %v478, %v497
    %499 = vdwg.mxu0
    %500 = vmatpush.msra.mxu0 %v169
    %501 = vmatpush.msra.mxu0 %v161
    %502 = vmatpush.msra.mxu0 %v153
    %503 = vmatpush.msra.mxu0 %v145
    %504 = vmatpush.msra.mxu0 %v137
    %505 = vmatpush.msra.mxu0 %v129
    %506 = vmatpush.msra.mxu0 %v121
    %507 = vmatpush.msra.mxu0 %v113
    %508 = vmatpush.msra.mxu0 %v105
    %509 = vmatpush.msra.mxu0 %v97
    %510 = vmatpush.msra.mxu0 %v89
    %511 = vmatpush.msra.mxu0 %v81
    %512 = vmatpush.msra.mxu0 %v73
    %513 = vmatpush.msra.mxu0 %v65
    %514 = vmatpush.msra.mxu0 %v57
    %515 = vmatpush.msra.mxu0 %v49
    %516 = vmatmul.f32.gmra.mxu0 %v42
    %v517 = vpop.f32.mrf.mxu0
    %v518 = vadd.f32 0.0, %v517
    %519 = vdwg.mxu0
    %520 = vmatpush.msra.mxu0 %v297
    %521 = vmatpush.msra.mxu0 %v289
    %522 = vmatpush.msra.mxu0 %v281
    %523 = vmatpush.msra.mxu0 %v273
    %524 = vmatpush.msra.mxu0 %v265
    %525 = vmatpush.msra.mxu0 %v257
    %526 = vmatpush.msra.mxu0 %v249
    %527 = vmatpush.msra.mxu0 %v241
    %528 = vmatpush.msra.mxu0 %v233
    %529 = vmatpush.msra.mxu0 %v225
    %530 = vmatpush.msra.mxu0 %v217
    %531 = vmatpush.msra.mxu0 %v209
    %532 = vmatpush.msra.mxu0 %v201
    %533 = vmatpush.msra.mxu0 %v193
    %534 = vmatpush.msra.mxu0 %v185
    %535 = vmatpush.msra.mxu0 %v177
    %536 = vmatmul.f32.gmra.mxu0 %v43
    %v537 = vpop.f32.mrf.mxu0
    %v538 = vadd.f32 %v518, %v537
    %539 = vdwg.mxu0
    %540 = vmatpush.msra.mxu0 %v170
    %541 = vmatpush.msra.mxu0 %v162
    %542 = vmatpush.msra.mxu0 %v154
    %543 = vmatpush.msra.mxu0 %v146
    %544 = vmatpush.msra.mxu0 %v138
    %545 = vmatpush.msra.mxu0 %v130
    %546 = vmatpush.msra.mxu0 %v122
    %547 = vmatpush.msra.mxu0 %v114
    %548 = vmatpush.msra.mxu0 %v106
    %549 = vmatpush.msra.mxu0 %v98
    %550 = vmatpush.msra.mxu0 %v90
    %551 = vmatpush.msra.mxu0 %v82
    %552 = vmatpush.msra.mxu0 %v74
    %553 = vmatpush.msra.mxu0 %v66
    %554 = vmatpush.msra.mxu0 %v58
    %555 = vmatpush.msra.mxu0 %v50
    %556 = vmatmul.f32.gmra.mxu0 %v42
    %v557 = vpop.f32.mrf.mxu0
    %v558 = vadd.f32 0.0, %v557
    %559 = vdwg.mxu0
    %560 = vmatpush.msra.mxu0 %v298
    %561 = vmatpush.msra.mxu0 %v290
    %562 = vmatpush.msra.mxu0 %v282
    %563 = vmatpush.msra.mxu0 %v274
    %564 = vmatpush.msra.mxu0 %v266
    %565 = vmatpush.msra.mxu0 %v258
    %566 = vmatpush.msra.mxu0 %v250
    %567 = vmatpush.msra.mxu0 %v242
    %568 = vmatpush.msra.mxu0 %v234
    %569 = vmatpush.msra.mxu0 %v226
    %570 = vmatpush.msra.mxu0 %v218
    %571 = vmatpush.msra.mxu0 %v210
    %572 = vmatpush.msra.mxu0 %v202
    %573 = vmatpush.msra.mxu0 %v194
    %574 = vmatpush.msra.mxu0 %v186
    %575 = vmatpush.msra.mxu0 %v178
    %576 = vmatmul.f32.gmra.mxu0 %v43
    %v577 = vpop.f32.mrf.mxu0
    %v578 = vadd.f32 %v558, %v577
    %579 = vdwg.mxu0
    %580 = vmatpush.msra.mxu0 %v171
    %581 = vmatpush.msra.mxu0 %v163
    %582 = vmatpush.msra.mxu0 %v155
    %583 = vmatpush.msra.mxu0 %v147
    %584 = vmatpush.msra.mxu0 %v139
    %585 = vmatpush.msra.mxu0 %v131
    %586 = vmatpush.msra.mxu0 %v123
    %587 = vmatpush.msra.mxu0 %v115
    %588 = vmatpush.msra.mxu0 %v107
    %589 = vmatpush.msra.mxu0 %v99
    %590 = vmatpush.msra.mxu0 %v91
    %591 = vmatpush.msra.mxu0 %v83
    %592 = vmatpush.msra.mxu0 %v75
    %593 = vmatpush.msra.mxu0 %v67
    %594 = vmatpush.msra.mxu0 %v59
    %595 = vmatpush.msra.mxu0 %v51
    %596 = vmatmul.f32.gmra.mxu0 %v42
    %v597 = vpop.f32.mrf.mxu0
    %v598 = vadd.f32 0.0, %v597
    %599 = vdwg.mxu0
    %600 = vmatpush.msra.mxu0 %v299
    %601 = vmatpush.msra.mxu0 %v291
    %602 = vmatpush.msra.mxu0 %v283
    %603 = vmatpush.msra.mxu0 %v275
    %604 = vmatpush.msra.mxu0 %v267
    %605 = vmatpush.msra.mxu0 %v259
    %606 = vmatpush.msra.mxu0 %v251
    %607 = vmatpush.msra.mxu0 %v243
    %608 = vmatpush.msra.mxu0 %v235
    %609 = vmatpush.msra.mxu0 %v227
    %610 = vmatpush.msra.mxu0 %v219
    %611 = vmatpush.msra.mxu0 %v211
    %612 = vmatpush.msra.mxu0 %v203
    %613 = vmatpush.msra.mxu0 %v195
    %614 = vmatpush.msra.mxu0 %v187
    %615 = vmatpush.msra.mxu0 %v179
    %616 = vmatmul.f32.gmra.mxu0 %v43
    %v617 = vpop.f32.mrf.mxu0
    %v618 = vadd.f32 %v598, %v617
    %619 = vdwg.mxu0
    %620 = vst [vmem:[#allocation7] sm:$0xff] %v338
    %621 = vst [vmem:[#allocation7 + $0x8] sm:$0xff] %v378
    %622 = vst [vmem:[#allocation7 + $0x10] sm:$0xff] %v418
    %623 = vst [vmem:[#allocation7 + $0x18] sm:$0xff] %v458
    %624 = vst [vmem:[#allocation7 + $0x20] sm:$0xff] %v498
    %625 = vst [vmem:[#allocation7 + $0x28] sm:$0xff] %v538
    %626 = vst [vmem:[#allocation7 + $0x30] sm:$0xff] %v578
    %627 = vst [vmem:[#allocation7 + $0x38] sm:$0xff] %v618
    // Predicated region
    $region18: #{tpu_custom_call.1} parent=1 // pred_check
      _
    $region19: #{tpu_custom_call.1} parent=1 // pred_check_branch
      %629 = sbr.rel (0) target = $region21
    $region20: #{tpu_custom_call.1} parent=1 // pred_region
      %631 = vsyncadd [#allocation4], 0
      %s633 = sshll.u32 [#allocation7], 4
      %s634 = int_to_ptr.vmem [resolvable:$true] %s633
      %s635 = sshll.u32 %s2, 4
      %s636 = int_to_ptr.hbm [resolvable:$true] %s635
      %638 = dma.vmem_to_hbm [thread:$0]  %s634, 1024, %s636, [#allocation4]
    $region21: #{tpu_custom_call.1} parent=1 // pred_fallthru
      _
    // Predicated region
    $region22: #{tpu_custom_call.1} parent=1 // pred_check
      _
    $region23: #{tpu_custom_call.1} parent=1 // pred_check_branch
      %640 = sbr.rel (0) target = $region25
    $region24: #{tpu_custom_call.1} parent=1 // pred_region
      %642 = dma.done [#allocation4], 1024
    $region25: #{tpu_custom_call.1} parent=1 // pred_fallthru
      _
    %643 = vsyncpa [#allocation3], 1
    %644 = vsyncpa [#allocation6], 1
    %645 = vsyncpa [#allocation4], 1

// kernel: tpu_custom_call.1
$region0: #{tpu_custom_call.1}
  #allocation0 [shape = 'u32[]', space=smem, size = 0x4, offset = 0x4, fixed_abs, tag = 'smem constant byte address 0x4 - core index']
  #allocation1 [shape = 'u32[72,128]{1,0:T(1,128)}', space=vmem, size = 0x9000, scoped, tag = 'internal scratch']
  %s0 = inlined_call_operand.hbm [shape: f32[8,256], index: 0, kind: input, shape index: {}]
  %s1 = inlined_call_operand.hbm [shape: f32[256,1024], index: 1, kind: input, shape index: {}]
  %s2 = inlined_call_operand.hbm [shape: f32[8,1024], index: 2, kind: output, shape index: {}]
  %s3 = sld [smem:[#allocation0]]
  $region26: #{tpu_custom_call.1} parent=0
    _
  %s5 = ssub.s32 1, %s3
  %s6 = scalar_select 0, %s5, %s3
  $region1: #{tpu_custom_call.1} parent=0
    #allocation2 [shape = 'u8[8192]{0}', space=vmem, size = 0x2000, scoped, tag = 'input window, operand 0, single buffered']
    #allocation3 [shape = 's32[1]{0}', space=sflag, size = 0x4, scoped, tag = 'scoped memory for tpu_custom_call.1']
    #allocation4 [shape = 's32[1]{0}', space=sflag, size = 0x4, scoped, tag = 'scoped memory for tpu_custom_call.1']
    #allocation5 [shape = 'u8[1048576]{0}', space=vmem, size = 0x100000, scoped, tag = 'input window, operand 1, single buffered']
    #allocation6 [shape = 's32[1]{0}', space=sflag, size = 0x4, scoped, tag = 'scoped memory for tpu_custom_call.1']
    #allocation7 [shape = 'u8[32768]{0}', space=vmem, size = 0x8000, scoped, tag = 'output window, operand 0, single buffered']
    %7 = vsyncpa [#allocation3], 0
    %8 = vsyncpa [#allocation6], 0
    %9 = vsyncpa [#allocation4], 0
    // Predicated region
    $region2: #{tpu_custom_call.1} parent=1 // pred_check
      _
    $region3: #{tpu_custom_call.1} parent=1 // pred_check_branch
      %11 = sbr.rel (0) target = $region5
    $region4: #{tpu_custom_call.1} parent=1 // pred_region
      %13 = vsyncadd [#allocation3], 0
      %s15 = sshll.u32 %s0, 4
      %s16 = int_to_ptr.hbm [resolvable:$true] %s15
      %s17 = sshll.u32 [#allocation2], 4
      %s18 = int_to_ptr.vmem [resolvable:$true] %s17
      %20 = dma.hbm_to_vmem [thread:$0]  %s16, 256, %s18, [#allocation3]
    $region5: #{tpu_custom_call.1} parent=1 // pred_fallthru
      _
    // Predicated region
    $region6: #{tpu_custom_call.1} parent=1 // pred_check
      _
    $region7: #{tpu_custom_call.1} parent=1 // pred_check_branch
      %22 = sbr.rel (0) target = $region9
    $region8: #{tpu_custom_call.1} parent=1 // pred_region
      %24 = vsyncadd [#allocation6], 0
      %s25 = sshll.u32 %s1, 4
      %s26 = int_to_ptr.hbm [resolvable:$true] %s25
      %s27 = sshll.u32 [#allocation5], 4
      %s28 = int_to_ptr.vmem [resolvable:$true] %s27
      %33 = dma.hbm_to_vmem [thread:$0]  %s26, 32768, %s28, [#allocation6], 1024, 1024, 64
    $region9: #{tpu_custom_call.1} parent=1 // pred_fallthru
      _
    // Predicated region
    $region10: #{tpu_custom_call.1} parent=1 // pred_check
      _
    $region11: #{tpu_custom_call.1} parent=1 // pred_check_branch
      %35 = sbr.rel (0) target = $region13
    $region12: #{tpu_custom_call.1} parent=1 // pred_region
      %37 = dma.done [#allocation3], 256
    $region13: #{tpu_custom_call.1} parent=1 // pred_fallthru
      _
    // Predicated region
    $region14: #{tpu_custom_call.1} parent=1 // pred_check
      _
    $region15: #{tpu_custom_call.1} parent=1 // pred_check_branch
      %39 = sbr.rel (0) target = $region17
    $region16: #{tpu_custom_call.1} parent=1 // pred_region
      %41 = dma.done [#allocation6], 32768
    $region17: #{tpu_custom_call.1} parent=1 // pred_fallthru
      _
    %v42 = vld [vmem:[#allocation2] sm:$0xff]
    %v43 = vld [vmem:[#allocation2 + $0x8] sm:$0xff]
    %v44 = vld [vmem:[#allocation5] sm:$0xff]
    %v45 = vld [vmem:[#allocation5 + $0x8] sm:$0xff]
    %v46 = vld [vmem:[#allocation5 + $0x10] sm:$0xff]
    %v47 = vld [vmem:[#allocation5 + $0x18] sm:$0xff]
    %v48 = vld [vmem:[#allocation5 + $0x20] sm:$0xff]
    %v49 = vld [vmem:[#allocation5 + $0x28] sm:$0xff]
    %v50 = vld [vmem:[#allocation5 + $0x30] sm:$0xff]
    %v51 = vld [vmem:[#allocation5 + $0x38] sm:$0xff]
    %v52 = vld [vmem:[#allocation5 + $0x40] sm:$0xff]
    %v53 = vld [vmem:[#allocation5 + $0x48] sm:$0xff]
    %v54 = vld [vmem:[#allocation5 + $0x50] sm:$0xff]
    %v55 = vld [vmem:[#allocation5 + $0x58] sm:$0xff]
    %v56 = vld [vmem:[#allocation5 + $0x60] sm:$0xff]
    %v57 = vld [vmem:[#allocation5 + $0x68] sm:$0xff]
    %v58 = vld [vmem:[#allocation5 + $0x70] sm:$0xff]
    %v59 = vld [vmem:[#allocation5 + $0x78] sm:$0xff]
    %v60 = vld [vmem:[#allocation5 + $0x80] sm:$0xff]
    %v61 = vld [vmem:[#allocation5 + $0x88] sm:$0xff]
    %v62 = vld [vmem:[#allocation5 + $0x90] sm:$0xff]
    %v63 = vld [vmem:[#allocation5 + $0x98] sm:$0xff]
    %v64 = vld [vmem:[#allocation5 + $0xa0] sm:$0xff]
    %v65 = vld [vmem:[#allocation5 + $0xa8] sm:$0xff]
    %v66 = vld [vmem:[#allocation5 + $0xb0] sm:$0xff]
    %v67 = vld [vmem:[#allocation5 + $0xb8] sm:$0xff]
    %v68 = vld [vmem:[#allocation5 + $0xc0] sm:$0xff]
    %v69 = vld [vmem:[#allocation5 + $0xc8] sm:$0xff]
    %v70 = vld [vmem:[#allocation5 + $0xd0] sm:$0xff]
    %v71 = vld [vmem:[#allocation5 + $0xd8] sm:$0xff]
    %v72 = vld [vmem:[#allocation5 + $0xe0] sm:$0xff]
    %v73 = vld [vmem:[#allocation5 + $0xe8] sm:$0xff]
    %v74 = vld [vmem:[#allocation5 + $0xf0] sm:$0xff]
    %v75 = vld [vmem:[#allocation5 + $0xf8] sm:$0xff]
    %v76 = vld [vmem:[#allocation5 + $0x100] sm:$0xff]
    %v77 = vld [vmem:[#allocation5 + $0x108] sm:$0xff]
    %v78 = vld [vmem:[#allocation5 + $0x110] sm:$0xff]
    %v79 = vld [vmem:[#allocation5 + $0x118] sm:$0xff]
    %v80 = vld [vmem:[#allocation5 + $0x120] sm:$0xff]
    %v81 = vld [vmem:[#allocation5 + $0x128] sm:$0xff]
    %v82 = vld [vmem:[#allocation5 + $0x130] sm:$0xff]
    %v83 = vld [vmem:[#allocation5 + $0x138] sm:$0xff]
    %v84 = vld [vmem:[#allocation5 + $0x140] sm:$0xff]
    %v85 = vld [vmem:[#allocation5 + $0x148] sm:$0xff]
    %v86 = vld [vmem:[#allocation5 + $0x150] sm:$0xff]
    %v87 = vld [vmem:[#allocation5 + $0x158] sm:$0xff]
    %v88 = vld [vmem:[#allocation5 + $0x160] sm:$0xff]
    %v89 = vld [vmem:[#allocation5 + $0x168] sm:$0xff]
    %v90 = vld [vmem:[#allocation5 + $0x170] sm:$0xff]
    %v91 = vld [vmem:[#allocation5 + $0x178] sm:$0xff]
    %v92 = vld [vmem:[#allocation5 + $0x180] sm:$0xff]
    %v93 = vld [vmem:[#allocation5 + $0x188] sm:$0xff]
    %v94 = vld [vmem:[#allocation5 + $0x190] sm:$0xff]
    %v95 = vld [vmem:[#allocation5 + $0x198] sm:$0xff]
    %v96 = vld [vmem:[#allocation5 + $0x1a0] sm:$0xff]
    %v97 = vld [vmem:[#allocation5 + $0x1a8] sm:$0xff]
    %v98 = vld [vmem:[#allocation5 + $0x1b0] sm:$0xff]
    %v99 = vld [vmem:[#allocation5 + $0x1b8] sm:$0xff]
    %v100 = vld [vmem:[#allocation5 + $0x1c0] sm:$0xff]
    %v101 = vld [vmem:[#allocation5 + $0x1c8] sm:$0xff]
    %v102 = vld [vmem:[#allocation5 + $0x1d0] sm:$0xff]
    %v103 = vld [vmem:[#allocation5 + $0x1d8] sm:$0xff]
    %v104 = vld [vmem:[#allocation5 + $0x1e0] sm:$0xff]
    %v105 = vld [vmem:[#allocation5 + $0x1e8] sm:$0xff]
    %v106 = vld [vmem:[#allocation5 + $0x1f0] sm:$0xff]
    %v107 = vld [vmem:[#allocation5 + $0x1f8] sm:$0xff]
    %v108 = vld [vmem:[#allocation5 + $0x200] sm:$0xff]
    %v109 = vld [vmem:[#allocation5 + $0x208] sm:$0xff]
    %v110 = vld [vmem:[#allocation5 + $0x210] sm:$0xff]
    %v111 = vld [vmem:[#allocation5 + $0x218] sm:$0xff]
    %v112 = vld [vmem:[#allocation5 + $0x220] sm:$0xff]
    %v113 = vld [vmem:[#allocation5 + $0x228] sm:$0xff]
    %v114 = vld [vmem:[#allocation5 + $0x230] sm:$0xff]
    %v115 = vld [vmem:[#allocation5 + $0x238] sm:$0xff]
    %v116 = vld [vmem:[#allocation5 + $0x240] sm:$0xff]
    %v117 = vld [vmem:[#allocation5 + $0x248] sm:$0xff]
    %v118 = vld [vmem:[#allocation5 + $0x250] sm:$0xff]
    %v119 = vld [vmem:[#allocation5 + $0x258] sm:$0xff]
    %v120 = vld [vmem:[#allocation5 + $0x260] sm:$0xff]
    %v121 = vld [vmem:[#allocation5 + $0x268] sm:$0xff]
    %v122 = vld [vmem:[#allocation5 + $0x270] sm:$0xff]
    %v123 = vld [vmem:[#allocation5 + $0x278] sm:$0xff]
    %v124 = vld [vmem:[#allocation5 + $0x280] sm:$0xff]
    %v125 = vld [vmem:[#allocation5 + $0x288] sm:$0xff]
    %v126 = vld [vmem:[#allocation5 + $0x290] sm:$0xff]
    %v127 = vld [vmem:[#allocation5 + $0x298] sm:$0xff]
    %v128 = vld [vmem:[#allocation5 + $0x2a0] sm:$0xff]
    %v129 = vld [vmem:[#allocation5 + $0x2a8] sm:$0xff]
    %v130 = vld [vmem:[#allocation5 + $0x2b0] sm:$0xff]
    %v131 = vld [vmem:[#allocation5 + $0x2b8] sm:$0xff]
    %v132 = vld [vmem:[#allocation5 + $0x2c0] sm:$0xff]
    %v133 = vld [vmem:[#allocation5 + $0x2c8] sm:$0xff]
    %v134 = vld [vmem:[#allocation5 + $0x2d0] sm:$0xff]
    %v135 = vld [vmem:[#allocation5 + $0x2d8] sm:$0xff]
    %v136 = vld [vmem:[#allocation5 + $0x2e0] sm:$0xff]
    %v137 = vld [vmem:[#allocation5 + $0x2e8] sm:$0xff]
    %v138 = vld [vmem:[#allocation5 + $0x2f0] sm:$0xff]
    %v139 = vld [vmem:[#allocation5 + $0x2f8] sm:$0xff]
    %v140 = vld [vmem:[#allocation5 + $0x300] sm:$0xff]
    %v141 = vld [vmem:[#allocation5 + $0x308] sm:$0xff]
    %v142 = vld [vmem:[#allocation5 + $0x310] sm:$0xff]
    %v143 = vld [vmem:[#allocation5 + $0x318] sm:$0xff]
    %v144 = vld [vmem:[#allocation5 + $0x320] sm:$0xff]
    %v145 = vld [vmem:[#allocation5 + $0x328] sm:$0xff]
    %v146 = vld [vmem:[#allocation5 + $0x330] sm:$0xff]
    %v147 = vld [vmem:[#allocation5 + $0x338] sm:$0xff]
    %v148 = vld [vmem:[#allocation5 + $0x340] sm:$0xff]
    %v149 = vld [vmem:[#allocation5 + $0x348] sm:$0xff]
    %v150 = vld [vmem:[#allocation5 + $0x350] sm:$0xff]
    %v151 = vld [vmem:[#allocation5 + $0x358] sm:$0xff]
    %v152 = vld [vmem:[#allocation5 + $0x360] sm:$0xff]
    %v153 = vld [vmem:[#allocation5 + $0x368] sm:$0xff]
    %v154 = vld [vmem:[#allocation5 + $0x370] sm:$0xff]
    %v155 = vld [vmem:[#allocation5 + $0x378] sm:$0xff]
    %v156 = vld [vmem:[#allocation5 + $0x380] sm:$0xff]
    %v157 = vld [vmem:[#allocation5 + $0x388] sm:$0xff]
    %v158 = vld [vmem:[#allocation5 + $0x390] sm:$0xff]
    %v159 = vld [vmem:[#allocation5 + $0x398] sm:$0xff]
    %v160 = vld [vmem:[#allocation5 + $0x3a0] sm:$0xff]
    %v161 = vld [vmem:[#allocation5 + $0x3a8] sm:$0xff]
    %v162 = vld [vmem:[#allocation5 + $0x3b0] sm:$0xff]
    %v163 = vld [vmem:[#allocation5 + $0x3b8] sm:$0xff]
    %v164 = vld [vmem:[#allocation5 + $0x3c0] sm:$0xff]
    %v165 = vld [vmem:[#allocation5 + $0x3c8] sm:$0xff]
    %v166 = vld [vmem:[#allocation5 + $0x3d0] sm:$0xff]
    %v167 = vld [vmem:[#allocation5 + $0x3d8] sm:$0xff]
    %v168 = vld [vmem:[#allocation5 + $0x3e0] sm:$0xff]
    %v169 = vld [vmem:[#allocation5 + $0x3e8] sm:$0xff]
    %v170 = vld [vmem:[#allocation5 + $0x3f0] sm:$0xff]
    %v171 = vld [vmem:[#allocation5 + $0x3f8] sm:$0xff]
    %v172 = vld [vmem:[#allocation5 + $0x400] sm:$0xff]
    %v173 = vld [vmem:[#allocation5 + $0x408] sm:$0xff]
    %v174 = vld [vmem:[#allocation5 + $0x410] sm:$0xff]
    %v175 = vld [vmem:[#allocation5 + $0x418] sm:$0xff]
    %v176 = vld [vmem:[#allocation5 + $0x420] sm:$0xff]
    %v177 = vld [vmem:[#allocation5 + $0x428] sm:$0xff]
    %v178 = vld [vmem:[#allocation5 + $0x430] sm:$0xff]
    %v179 = vld [vmem:[#allocation5 + $0x438] sm:$0xff]
    %v180 = vld [vmem:[#allocation5 + $0x440] sm:$0xff]
    %v181 = vld [vmem:[#allocation5 + $0x448] sm:$0xff]
    %v182 = vld [vmem:[#allocation5 + $0x450] sm:$0xff]
    %v183 = vld [vmem:[#allocation5 + $0x458] sm:$0xff]
    %v184 = vld [vmem:[#allocation5 + $0x460] sm:$0xff]
    %v185 = vld [vmem:[#allocation5 + $0x468] sm:$0xff]
    %v186 = vld [vmem:[#allocation5 + $0x470] sm:$0xff]
    %v187 = vld [vmem:[#allocation5 + $0x478] sm:$0xff]
    %v188 = vld [vmem:[#allocation5 + $0x480] sm:$0xff]
    %v189 = vld [vmem:[#allocation5 + $0x488] sm:$0xff]
    %v190 = vld [vmem:[#allocation5 + $0x490] sm:$0xff]
    %v191 = vld [vmem:[#allocation5 + $0x498] sm:$0xff]
    %v192 = vld [vmem:[#allocation5 + $0x4a0] sm:$0xff]
    %v193 = vld [vmem:[#allocation5 + $0x4a8] sm:$0xff]
    %v194 = vld [vmem:[#allocation5 + $0x4b0] sm:$0xff]
    %v195 = vld [vmem:[#allocation5 + $0x4b8] sm:$0xff]
    %v196 = vld [vmem:[#allocation5 + $0x4c0] sm:$0xff]
    %v197 = vld [vmem:[#allocation5 + $0x4c8] sm:$0xff]
    %v198 = vld [vmem:[#allocation5 + $0x4d0] sm:$0xff]
    %v199 = vld [vmem:[#allocation5 + $0x4d8] sm:$0xff]
    %v200 = vld [vmem:[#allocation5 + $0x4e0] sm:$0xff]
    %v201 = vld [vmem:[#allocation5 + $0x4e8] sm:$0xff]
    %v202 = vld [vmem:[#allocation5 + $0x4f0] sm:$0xff]
    %v203 = vld [vmem:[#allocation5 + $0x4f8] sm:$0xff]
    %v204 = vld [vmem:[#allocation5 + $0x500] sm:$0xff]
    %v205 = vld [vmem:[#allocation5 + $0x508] sm:$0xff]
    %v206 = vld [vmem:[#allocation5 + $0x510] sm:$0xff]
    %v207 = vld [vmem:[#allocation5 + $0x518] sm:$0xff]
    %v208 = vld [vmem:[#allocation5 + $0x520] sm:$0xff]
    %v209 = vld [vmem:[#allocation5 + $0x528] sm:$0xff]
    %v210 = vld [vmem:[#allocation5 + $0x530] sm:$0xff]
    %v211 = vld [vmem:[#allocation5 + $0x538] sm:$0xff]
    %v212 = vld [vmem:[#allocation5 + $0x540] sm:$0xff]
    %v213 = vld [vmem:[#allocation5 + $0x548] sm:$0xff]
    %v214 = vld [vmem:[#allocation5 + $0x550] sm:$0xff]
    %v215 = vld [vmem:[#allocation5 + $0x558] sm:$0xff]
    %v216 = vld [vmem:[#allocation5 + $0x560] sm:$0xff]
    %v217 = vld [vmem:[#allocation5 + $0x568] sm:$0xff]
    %v218 = vld [vmem:[#allocation5 + $0x570] sm:$0xff]
    %v219 = vld [vmem:[#allocation5 + $0x578] sm:$0xff]
    %v220 = vld [vmem:[#allocation5 + $0x580] sm:$0xff]
    %v221 = vld [vmem:[#allocation5 + $0x588] sm:$0xff]
    %v222 = vld [vmem:[#allocation5 + $0x590] sm:$0xff]
    %v223 = vld [vmem:[#allocation5 + $0x598] sm:$0xff]
    %v224 = vld [vmem:[#allocation5 + $0x5a0] sm:$0xff]
    %v225 = vld [vmem:[#allocation5 + $0x5a8] sm:$0xff]
    %v226 = vld [vmem:[#allocation5 + $0x5b0] sm:$0xff]
    %v227 = vld [vmem:[#allocation5 + $0x5b8] sm:$0xff]
    %v228 = vld [vmem:[#allocation5 + $0x5c0] sm:$0xff]
    %v229 = vld [vmem:[#allocation5 + $0x5c8] sm:$0xff]
    %v230 = vld [vmem:[#allocation5 + $0x5d0] sm:$0xff]
    %v231 = vld [vmem:[#allocation5 + $0x5d8] sm:$0xff]
    %v232 = vld [vmem:[#allocation5 + $0x5e0] sm:$0xff]
    %v233 = vld [vmem:[#allocation5 + $0x5e8] sm:$0xff]
    %v234 = vld [vmem:[#allocation5 + $0x5f0] sm:$0xff]
    %v235 = vld [vmem:[#allocation5 + $0x5f8] sm:$0xff]
    %v236 = vld [vmem:[#allocation5 + $0x600] sm:$0xff]
    %v237 = vld [vmem:[#allocation5 + $0x608] sm:$0xff]
    %v238 = vld [vmem:[#allocation5 + $0x610] sm:$0xff]
    %v239 = vld [vmem:[#allocation5 + $0x618] sm:$0xff]
    %v240 = vld [vmem:[#allocation5 + $0x620] sm:$0xff]
    %v241 = vld [vmem:[#allocation5 + $0x628] sm:$0xff]
    %v242 = vld [vmem:[#allocation5 + $0x630] sm:$0xff]
    %v243 = vld [vmem:[#allocation5 + $0x638] sm:$0xff]
    %v244 = vld [vmem:[#allocation5 + $0x640] sm:$0xff]
    %v245 = vld [vmem:[#allocation5 + $0x648] sm:$0xff]
    %v246 = vld [vmem:[#allocation5 + $0x650] sm:$0xff]
    %v247 = vld [vmem:[#allocation5 + $0x658] sm:$0xff]
    %v248 = vld [vmem:[#allocation5 + $0x660] sm:$0xff]
    %v249 = vld [vmem:[#allocation5 + $0x668] sm:$0xff]
    %v250 = vld [vmem:[#allocation5 + $0x670] sm:$0xff]
    %v251 = vld [vmem:[#allocation5 + $0x678] sm:$0xff]
    %v252 = vld [vmem:[#allocation5 + $0x680] sm:$0xff]
    %v253 = vld [vmem:[#allocation5 + $0x688] sm:$0xff]
    %v254 = vld [vmem:[#allocation5 + $0x690] sm:$0xff]
    %v255 = vld [vmem:[#allocation5 + $0x698] sm:$0xff]
    %v256 = vld [vmem:[#allocation5 + $0x6a0] sm:$0xff]
    %v257 = vld [vmem:[#allocation5 + $0x6a8] sm:$0xff]
    %v258 = vld [vmem:[#allocation5 + $0x6b0] sm:$0xff]
    %v259 = vld [vmem:[#allocation5 + $0x6b8] sm:$0xff]
    %v260 = vld [vmem:[#allocation5 + $0x6c0] sm:$0xff]
    %v261 = vld [vmem:[#allocation5 + $0x6c8] sm:$0xff]
    %v262 = vld [vmem:[#allocation5 + $0x6d0] sm:$0xff]
    %v263 = vld [vmem:[#allocation5 + $0x6d8] sm:$0xff]
    %v264 = vld [vmem:[#allocation5 + $0x6e0] sm:$0xff]
    %v265 = vld [vmem:[#allocation5 + $0x6e8] sm:$0xff]
    %v266 = vld [vmem:[#allocation5 + $0x6f0] sm:$0xff]
    %v267 = vld [vmem:[#allocation5 + $0x6f8] sm:$0xff]
    %v268 = vld [vmem:[#allocation5 + $0x700] sm:$0xff]
    %v269 = vld [vmem:[#allocation5 + $0x708] sm:$0xff]
    %v270 = vld [vmem:[#allocation5 + $0x710] sm:$0xff]
    %v271 = vld [vmem:[#allocation5 + $0x718] sm:$0xff]
    %v272 = vld [vmem:[#allocation5 + $0x720] sm:$0xff]
    %v273 = vld [vmem:[#allocation5 + $0x728] sm:$0xff]
    %v274 = vld [vmem:[#allocation5 + $0x730] sm:$0xff]
    %v275 = vld [vmem:[#allocation5 + $0x738] sm:$0xff]
    %v276 = vld [vmem:[#allocation5 + $0x740] sm:$0xff]
    %v277 = vld [vmem:[#allocation5 + $0x748] sm:$0xff]
    %v278 = vld [vmem:[#allocation5 + $0x750] sm:$0xff]
    %v279 = vld [vmem:[#allocation5 + $0x758] sm:$0xff]
    %v280 = vld [vmem:[#allocation5 + $0x760] sm:$0xff]
    %v281 = vld [vmem:[#allocation5 + $0x768] sm:$0xff]
    %v282 = vld [vmem:[#allocation5 + $0x770] sm:$0xff]
    %v283 = vld [vmem:[#allocation5 + $0x778] sm:$0xff]
    %v284 = vld [vmem:[#allocation5 + $0x780] sm:$0xff]
    %v285 = vld [vmem:[#allocation5 + $0x788] sm:$0xff]
    %v286 = vld [vmem:[#allocation5 + $0x790] sm:$0xff]
    %v287 = vld [vmem:[#allocation5 + $0x798] sm:$0xff]
    %v288 = vld [vmem:[#allocation5 + $0x7a0] sm:$0xff]
    %v289 = vld [vmem:[#allocation5 + $0x7a8] sm:$0xff]
    %v290 = vld [vmem:[#allocation5 + $0x7b0] sm:$0xff]
    %v291 = vld [vmem:[#allocation5 + $0x7b8] sm:$0xff]
    %v292 = vld [vmem:[#allocation5 + $0x7c0] sm:$0xff]
    %v293 = vld [vmem:[#allocation5 + $0x7c8] sm:$0xff]
    %v294 = vld [vmem:[#allocation5 + $0x7d0] sm:$0xff]
    %v295 = vld [vmem:[#allocation5 + $0x7d8] sm:$0xff]
    %v296 = vld [vmem:[#allocation5 + $0x7e0] sm:$0xff]
    %v297 = vld [vmem:[#allocation5 + $0x7e8] sm:$0xff]
    %v298 = vld [vmem:[#allocation5 + $0x7f0] sm:$0xff]
    %v299 = vld [vmem:[#allocation5 + $0x7f8] sm:$0xff]
    %300 = vmatpush.msra.mxu0 %v164
    %301 = vmatpush.msra.mxu0 %v156
    %302 = vmatpush.msra.mxu0 %v148
    %303 = vmatpush.msra.mxu0 %v140
    %304 = vmatpush.msra.mxu0 %v132
    %305 = vmatpush.msra.mxu0 %v124
    %306 = vmatpush.msra.mxu0 %v116
    %307 = vmatpush.msra.mxu0 %v108
    %308 = vmatpush.msra.mxu0 %v100
    %309 = vmatpush.msra.mxu0 %v92
    %310 = vmatpush.msra.mxu0 %v84
    %311 = vmatpush.msra.mxu0 %v76
    %312 = vmatpush.msra.mxu0 %v68
    %313 = vmatpush.msra.mxu0 %v60
    %314 = vmatpush.msra.mxu0 %v52
    %315 = vmatpush.msra.mxu0 %v44
    %316 = vmatmul.f32.gmra.mxu0 %v42
    %v317 = vpop.f32.mrf.mxu0
    %v318 = vadd.f32 0.0, %v317
    %319 = vdwg.mxu0
    %320 = vmatpush.msra.mxu0 %v292
    %321 = vmatpush.msra.mxu0 %v284
    %322 = vmatpush.msra.mxu0 %v276
    %323 = vmatpush.msra.mxu0 %v268
    %324 = vmatpush.msra.mxu0 %v260
    %325 = vmatpush.msra.mxu0 %v252
    %326 = vmatpush.msra.mxu0 %v244
    %327 = vmatpush.msra.mxu0 %v236
    %328 = vmatpush.msra.mxu0 %v228
    %329 = vmatpush.msra.mxu0 %v220
    %330 = vmatpush.msra.mxu0 %v212
    %331 = vmatpush.msra.mxu0 %v204
    %332 = vmatpush.msra.mxu0 %v196
    %333 = vmatpush.msra.mxu0 %v188
    %334 = vmatpush.msra.mxu0 %v180
    %335 = vmatpush.msra.mxu0 %v172
    %336 = vmatmul.f32.gmra.mxu0 %v43
    %v337 = vpop.f32.mrf.mxu0
    %v338 = vadd.f32 %v318, %v337
    %339 = vdwg.mxu0
    %340 = vmatpush.msra.mxu0 %v165
    %341 = vmatpush.msra.mxu0 %v157
    %342 = vmatpush.msra.mxu0 %v149
    %343 = vmatpush.msra.mxu0 %v141
    %344 = vmatpush.msra.mxu0 %v133
    %345 = vmatpush.msra.mxu0 %v125
    %346 = vmatpush.msra.mxu0 %v117
    %347 = vmatpush.msra.mxu0 %v109
    %348 = vmatpush.msra.mxu0 %v101
    %349 = vmatpush.msra.mxu0 %v93
    %350 = vmatpush.msra.mxu0 %v85
    %351 = vmatpush.msra.mxu0 %v77
    %352 = vmatpush.msra.mxu0 %v69
    %353 = vmatpush.msra.mxu0 %v61
    %354 = vmatpush.msra.mxu0 %v53
    %355 = vmatpush.msra.mxu0 %v45
    %356 = vmatmul.f32.gmra.mxu0 %v42
    %v357 = vpop.f32.mrf.mxu0
    %v358 = vadd.f32 0.0, %v357
    %359 = vdwg.mxu0
    %360 = vmatpush.msra.mxu0 %v293
    %361 = vmatpush.msra.mxu0 %v285
    %362 = vmatpush.msra.mxu0 %v277
    %363 = vmatpush.msra.mxu0 %v269
    %364 = vmatpush.msra.mxu0 %v261
    %365 = vmatpush.msra.mxu0 %v253
    %366 = vmatpush.msra.mxu0 %v245
    %367 = vmatpush.msra.mxu0 %v237
    %368 = vmatpush.msra.mxu0 %v229
    %369 = vmatpush.msra.mxu0 %v221
    %370 = vmatpush.msra.mxu0 %v213
    %371 = vmatpush.msra.mxu0 %v205
    %372 = vmatpush.msra.mxu0 %v197
    %373 = vmatpush.msra.mxu0 %v189
    %374 = vmatpush.msra.mxu0 %v181
    %375 = vmatpush.msra.mxu0 %v173
    %376 = vmatmul.f32.gmra.mxu0 %v43
    %v377 = vpop.f32.mrf.mxu0
    %v378 = vadd.f32 %v358, %v377
    %379 = vdwg.mxu0
    %380 = vmatpush.msra.mxu0 %v166
    %381 = vmatpush.msra.mxu0 %v158
    %382 = vmatpush.msra.mxu0 %v150
    %383 = vmatpush.msra.mxu0 %v142
    %384 = vmatpush.msra.mxu0 %v134
    %385 = vmatpush.msra.mxu0 %v126
    %386 = vmatpush.msra.mxu0 %v118
    %387 = vmatpush.msra.mxu0 %v110
    %388 = vmatpush.msra.mxu0 %v102
    %389 = vmatpush.msra.mxu0 %v94
    %390 = vmatpush.msra.mxu0 %v86
    %391 = vmatpush.msra.mxu0 %v78
    %392 = vmatpush.msra.mxu0 %v70
    %393 = vmatpush.msra.mxu0 %v62
    %394 = vmatpush.msra.mxu0 %v54
    %395 = vmatpush.msra.mxu0 %v46
    %396 = vmatmul.f32.gmra.mxu0 %v42
    %v397 = vpop.f32.mrf.mxu0
    %v398 = vadd.f32 0.0, %v397
    %399 = vdwg.mxu0
    %400 = vmatpush.msra.mxu0 %v294
    %401 = vmatpush.msra.mxu0 %v286
    %402 = vmatpush.msra.mxu0 %v278
    %403 = vmatpush.msra.mxu0 %v270
    %404 = vmatpush.msra.mxu0 %v262
    %405 = vmatpush.msra.mxu0 %v254
    %406 = vmatpush.msra.mxu0 %v246
    %407 = vmatpush.msra.mxu0 %v238
    %408 = vmatpush.msra.mxu0 %v230
    %409 = vmatpush.msra.mxu0 %v222
    %410 = vmatpush.msra.mxu0 %v214
    %411 = vmatpush.msra.mxu0 %v206
    %412 = vmatpush.msra.mxu0 %v198
    %413 = vmatpush.msra.mxu0 %v190
    %414 = vmatpush.msra.mxu0 %v182
    %415 = vmatpush.msra.mxu0 %v174
    %416 = vmatmul.f32.gmra.mxu0 %v43
    %v417 = vpop.f32.mrf.mxu0
    %v418 = vadd.f32 %v398, %v417
    %419 = vdwg.mxu0
    %420 = vmatpush.msra.mxu0 %v167
    %421 = vmatpush.msra.mxu0 %v159
    %422 = vmatpush.msra.mxu0 %v151
    %423 = vmatpush.msra.mxu0 %v143
    %424 = vmatpush.msra.mxu0 %v135
    %425 = vmatpush.msra.mxu0 %v127
    %426 = vmatpush.msra.mxu0 %v119
    %427 = vmatpush.msra.mxu0 %v111
    %428 = vmatpush.msra.mxu0 %v103
    %429 = vmatpush.msra.mxu0 %v95
    %430 = vmatpush.msra.mxu0 %v87
    %431 = vmatpush.msra.mxu0 %v79
    %432 = vmatpush.msra.mxu0 %v71
    %433 = vmatpush.msra.mxu0 %v63
    %434 = vmatpush.msra.mxu0 %v55
    %435 = vmatpush.msra.mxu0 %v47
    %436 = vmatmul.f32.gmra.mxu0 %v42
    %v437 = vpop.f32.mrf.mxu0
    %v438 = vadd.f32 0.0, %v437
    %439 = vdwg.mxu0
    %440 = vmatpush.msra.mxu0 %v295
    %441 = vmatpush.msra.mxu0 %v287
    %442 = vmatpush.msra.mxu0 %v279
    %443 = vmatpush.msra.mxu0 %v271
    %444 = vmatpush.msra.mxu0 %v263
    %445 = vmatpush.msra.mxu0 %v255
    %446 = vmatpush.msra.mxu0 %v247
    %447 = vmatpush.msra.mxu0 %v239
    %448 = vmatpush.msra.mxu0 %v231
    %449 = vmatpush.msra.mxu0 %v223
    %450 = vmatpush.msra.mxu0 %v215
    %451 = vmatpush.msra.mxu0 %v207
    %452 = vmatpush.msra.mxu0 %v199
    %453 = vmatpush.msra.mxu0 %v191
    %454 = vmatpush.msra.mxu0 %v183
    %455 = vmatpush.msra.mxu0 %v175
    %456 = vmatmul.f32.gmra.mxu0 %v43
    %v457 = vpop.f32.mrf.mxu0
    %v458 = vadd.f32 %v438, %v457
    %459 = vdwg.mxu0
    %460 = vmatpush.msra.mxu0 %v168
    %461 = vmatpush.msra.mxu0 %v160
    %462 = vmatpush.msra.mxu0 %v152
    %463 = vmatpush.msra.mxu0 %v144
    %464 = vmatpush.msra.mxu0 %v136
    %465 = vmatpush.msra.mxu0 %v128
    %466 = vmatpush.msra.mxu0 %v120
    %467 = vmatpush.msra.mxu0 %v112
    %468 = vmatpush.msra.mxu0 %v104
    %469 = vmatpush.msra.mxu0 %v96
    %470 = vmatpush.msra.mxu0 %v88
    %471 = vmatpush.msra.mxu0 %v80
    %472 = vmatpush.msra.mxu0 %v72
    %473 = vmatpush.msra.mxu0 %v64
    %474 = vmatpush.msra.mxu0 %v56
    %475 = vmatpush.msra.mxu0 %v48
    %476 = vmatmul.f32.gmra.mxu0 %v42
    %v477 = vpop.f32.mrf.mxu0
    %v478 = vadd.f32 0.0, %v477
    %479 = vdwg.mxu0
    %480 = vmatpush.msra.mxu0 %v296
    %481 = vmatpush.msra.mxu0 %v288
    %482 = vmatpush.msra.mxu0 %v280
    %483 = vmatpush.msra.mxu0 %v272
    %484 = vmatpush.msra.mxu0 %v264
    %485 = vmatpush.msra.mxu0 %v256
    %486 = vmatpush.msra.mxu0 %v248
    %487 = vmatpush.msra.mxu0 %v240
    %488 = vmatpush.msra.mxu0 %v232
    %489 = vmatpush.msra.mxu0 %v224
    %490 = vmatpush.msra.mxu0 %v216
    %491 = vmatpush.msra.mxu0 %v208
    %492 = vmatpush.msra.mxu0 %v200
    %493 = vmatpush.msra.mxu0 %v192
    %494 = vmatpush.msra.mxu0 %v184
    %495 = vmatpush.msra.mxu0 %v176
    %496 = vmatmul.f32.gmra.mxu0 %v43
    %v497 = vpop.f32.mrf.mxu0
    %v498 = vadd.f32 %v478, %v497
    %499 = vdwg.mxu0
    %500 = vmatpush.msra.mxu0 %v169
    %501 = vmatpush.msra.mxu0 %v161
    %502 = vmatpush.msra.mxu0 %v153
    %503 = vmatpush.msra.mxu0 %v145
    %504 = vmatpush.msra.mxu0 %v137
    %505 = vmatpush.msra.mxu0 %v129
    %506 = vmatpush.msra.mxu0 %v121
    %507 = vmatpush.msra.mxu0 %v113
    %508 = vmatpush.msra.mxu0 %v105
    %509 = vmatpush.msra.mxu0 %v97
    %510 = vmatpush.msra.mxu0 %v89
    %511 = vmatpush.msra.mxu0 %v81
    %512 = vmatpush.msra.mxu0 %v73
    %513 = vmatpush.msra.mxu0 %v65
    %514 = vmatpush.msra.mxu0 %v57
    %515 = vmatpush.msra.mxu0 %v49
    %516 = vmatmul.f32.gmra.mxu0 %v42
    %v517 = vpop.f32.mrf.mxu0
    %v518 = vadd.f32 0.0, %v517
    %519 = vdwg.mxu0
    %520 = vmatpush.msra.mxu0 %v297
    %521 = vmatpush.msra.mxu0 %v289
    %522 = vmatpush.msra.mxu0 %v281
    %523 = vmatpush.msra.mxu0 %v273
    %524 = vmatpush.msra.mxu0 %v265
    %525 = vmatpush.msra.mxu0 %v257
    %526 = vmatpush.msra.mxu0 %v249
    %527 = vmatpush.msra.mxu0 %v241
    %528 = vmatpush.msra.mxu0 %v233
    %529 = vmatpush.msra.mxu0 %v225
    %530 = vmatpush.msra.mxu0 %v217
    %531 = vmatpush.msra.mxu0 %v209
    %532 = vmatpush.msra.mxu0 %v201
    %533 = vmatpush.msra.mxu0 %v193
    %534 = vmatpush.msra.mxu0 %v185
    %535 = vmatpush.msra.mxu0 %v177
    %536 = vmatmul.f32.gmra.mxu0 %v43
    %v537 = vpop.f32.mrf.mxu0
    %v538 = vadd.f32 %v518, %v537
    %539 = vdwg.mxu0
    %540 = vmatpush.msra.mxu0 %v170
    %541 = vmatpush.msra.mxu0 %v162
    %542 = vmatpush.msra.mxu0 %v154
    %543 = vmatpush.msra.mxu0 %v146
    %544 = vmatpush.msra.mxu0 %v138
    %545 = vmatpush.msra.mxu0 %v130
    %546 = vmatpush.msra.mxu0 %v122
    %547 = vmatpush.msra.mxu0 %v114
    %548 = vmatpush.msra.mxu0 %v106
    %549 = vmatpush.msra.mxu0 %v98
    %550 = vmatpush.msra.mxu0 %v90
    %551 = vmatpush.msra.mxu0 %v82
    %552 = vmatpush.msra.mxu0 %v74
    %553 = vmatpush.msra.mxu0 %v66
    %554 = vmatpush.msra.mxu0 %v58
    %555 = vmatpush.msra.mxu0 %v50
    %556 = vmatmul.f32.gmra.mxu0 %v42
    %v557 = vpop.f32.mrf.mxu0
    %v558 = vadd.f32 0.0, %v557
    %559 = vdwg.mxu0
    %560 = vmatpush.msra.mxu0 %v298
    %561 = vmatpush.msra.mxu0 %v290
    %562 = vmatpush.msra.mxu0 %v282
    %563 = vmatpush.msra.mxu0 %v274
    %564 = vmatpush.msra.mxu0 %v266
    %565 = vmatpush.msra.mxu0 %v258
    %566 = vmatpush.msra.mxu0 %v250
    %567 = vmatpush.msra.mxu0 %v242
    %568 = vmatpush.msra.mxu0 %v234
    %569 = vmatpush.msra.mxu0 %v226
    %570 = vmatpush.msra.mxu0 %v218
    %571 = vmatpush.msra.mxu0 %v210
    %572 = vmatpush.msra.mxu0 %v202
    %573 = vmatpush.msra.mxu0 %v194
    %574 = vmatpush.msra.mxu0 %v186
    %575 = vmatpush.msra.mxu0 %v178
    %576 = vmatmul.f32.gmra.mxu0 %v43
    %v577 = vpop.f32.mrf.mxu0
    %v578 = vadd.f32 %v558, %v577
    %579 = vdwg.mxu0
    %580 = vmatpush.msra.mxu0 %v171
    %581 = vmatpush.msra.mxu0 %v163
    %582 = vmatpush.msra.mxu0 %v155
    %583 = vmatpush.msra.mxu0 %v147
    %584 = vmatpush.msra.mxu0 %v139
    %585 = vmatpush.msra.mxu0 %v131
    %586 = vmatpush.msra.mxu0 %v123
    %587 = vmatpush.msra.mxu0 %v115
    %588 = vmatpush.msra.mxu0 %v107
    %589 = vmatpush.msra.mxu0 %v99
    %590 = vmatpush.msra.mxu0 %v91
    %591 = vmatpush.msra.mxu0 %v83
    %592 = vmatpush.msra.mxu0 %v75
    %593 = vmatpush.msra.mxu0 %v67
    %594 = vmatpush.msra.mxu0 %v59
    %595 = vmatpush.msra.mxu0 %v51
    %596 = vmatmul.f32.gmra.mxu0 %v42
    %v597 = vpop.f32.mrf.mxu0
    %v598 = vadd.f32 0.0, %v597
    %599 = vdwg.mxu0
    %600 = vmatpush.msra.mxu0 %v299
    %601 = vmatpush.msra.mxu0 %v291
    %602 = vmatpush.msra.mxu0 %v283
    %603 = vmatpush.msra.mxu0 %v275
    %604 = vmatpush.msra.mxu0 %v267
    %605 = vmatpush.msra.mxu0 %v259
    %606 = vmatpush.msra.mxu0 %v251
    %607 = vmatpush.msra.mxu0 %v243
    %608 = vmatpush.msra.mxu0 %v235
    %609 = vmatpush.msra.mxu0 %v227
    %610 = vmatpush.msra.mxu0 %v219
    %611 = vmatpush.msra.mxu0 %v211
    %612 = vmatpush.msra.mxu0 %v203
    %613 = vmatpush.msra.mxu0 %v195
    %614 = vmatpush.msra.mxu0 %v187
    %615 = vmatpush.msra.mxu0 %v179
    %616 = vmatmul.f32.gmra.mxu0 %v43
    %v617 = vpop.f32.mrf.mxu0
    %v618 = vadd.f32 %v598, %v617
    %619 = vdwg.mxu0
    %620 = vst [vmem:[#allocation7] sm:$0xff] %v338
    %621 = vst [vmem:[#allocation7 + $0x8] sm:$0xff] %v378
    %622 = vst [vmem:[#allocation7 + $0x10] sm:$0xff] %v418
    %623 = vst [vmem:[#allocation7 + $0x18] sm:$0xff] %v458
    %624 = vst [vmem:[#allocation7 + $0x20] sm:$0xff] %v498
    %625 = vst [vmem:[#allocation7 + $0x28] sm:$0xff] %v538
    %626 = vst [vmem:[#allocation7 + $0x30] sm:$0xff] %v578
    %627 = vst [vmem:[#allocation7 + $0x38] sm:$0xff] %v618
    // Predicated region
    $region18: #{tpu_custom_call.1} parent=1 // pred_check
      _
    $region19: #{tpu_custom_call.1} parent=1 // pred_check_branch
      %629 = sbr.rel (0) target = $region21
    $region20: #{tpu_custom_call.1} parent=1 // pred_region
      %631 = vsyncadd [#allocation4], 0
      %s633 = sshll.u32 [#allocation7], 4
      %s634 = int_to_ptr.vmem [resolvable:$true] %s633
      %s635 = sshll.u32 %s2, 4
      %s636 = int_to_ptr.hbm [resolvable:$true] %s635
      %638 = dma.vmem_to_hbm [thread:$0]  %s634, 1024, %s636, [#allocation4]
    $region21: #{tpu_custom_call.1} parent=1 // pred_fallthru
      _
    // Predicated region
    $region22: #{tpu_custom_call.1} parent=1 // pred_check
      _
    $region23: #{tpu_custom_call.1} parent=1 // pred_check_branch
      %640 = sbr.rel (0) target = $region25
    $region24: #{tpu_custom_call.1} parent=1 // pred_region
      %642 = dma.done [#allocation4], 1024
    $region25: #{tpu_custom_call.1} parent=1 // pred_fallthru
      _
    %643 = vsyncpa [#allocation3], 1
    %644 = vsyncpa [#allocation6], 1
    %645 = vsyncpa [#allocation4], 1

</llo_original>
